<compile_context>
chip_gen: v6e
topology: v6e:2x2x1
jax: 0.10.0
libtpu: 0.0.40
codegen_flags: <defaults>
</compile_context>

<pallas_src>
import jax
import jax.numpy as jnp
from jax.experimental import pallas as pl
from jax.experimental.pallas import tpu as pltpu

HIDDEN_LAYER_UNITS = 128
TFIDF_DIM = 2255
N_CLASSES = 5
N_CLASSES_PAD = 128           # lane-dense output head; sliced back in wrapper
NEG_INF = -1e30               # padded logit bias -> exp() underflows to 0
DEFAULT_BATCH_TILE = 256      # multiple of 256 (v6e/v7x MXU) and 128 (v5e MXU)


def _round_up(n, m):
    return ((n + m - 1) // m) * m


# ------------------------------ Pallas kernel --------------------------------
def _tfidf_nn_kernel(x_ref, wh_ref, bh_ref, wo_ref, bo_ref, y_ref, z_ref):
    """Fused Tfidf_Nn forward for one batch tile.

    x:(TB,2255) f32, wh:(2255,128) bf16, bh:(1,128) f32,
    wo:(128,128) bf16 (cols >= n_classes are 0), bo:(1,128) f32 (cols >= n_classes are -1e30).
    Outputs: y:(TB,128) f32 tanh hidden, z:(TB,128) f32 softmax (cols >= n_classes are 0).
    """
    x = x_ref[...].astype(jnp.bfloat16)                         # cast in-kernel
    h = jnp.dot(x, wh_ref[...], preferred_element_type=jnp.float32)
    y = jnp.tanh(h + bh_ref[...])                               # (TB, 128) f32
    y_ref[...] = y

    # TODO(synk): nn.Dropout(0.1) is identity in eval mode; a training-mode
    # forward would need pltpu.prng_seed + prng_random_bits masking of y here.
    logits = jnp.dot(y.astype(jnp.bfloat16), wo_ref[...],
                     preferred_element_type=jnp.float32) + bo_ref[...]
    m = jnp.max(logits, axis=-1, keepdims=True)
    e = jnp.exp(logits - m)                                     # padded cols -> 0
    z_ref[...] = e / jnp.sum(e, axis=-1, keepdims=True)         # exact normalize


# ------------------------------ wrapper ---------------------------------------
@jax.jit
def tfidf_nn_forward(params, x):
    """x: (B, 2255) f32  ->  (y: (B, 128) f32, z: (B, n_classes) f32)."""
    b = x.shape[0]
    tb = min(DEFAULT_BATCH_TILE, _round_up(max(b, 1), 16))
    grid = (pl.cdiv(b, tb),)

    y, z_pad = pl.pallas_call(
        _tfidf_nn_kernel,
        grid=grid,
        in_specs=[
            pl.BlockSpec((tb, TFIDF_DIM), lambda i: (i, 0)),                 # x tile
            pl.BlockSpec((TFIDF_DIM, HIDDEN_LAYER_UNITS), lambda i: (0, 0)),  # wh resident
            pl.BlockSpec((1, HIDDEN_LAYER_UNITS), lambda i: (0, 0)),          # bh resident
            pl.BlockSpec((HIDDEN_LAYER_UNITS, N_CLASSES_PAD), lambda i: (0, 0)),  # wo resident
            pl.BlockSpec((1, N_CLASSES_PAD), lambda i: (0, 0)),               # bo resident
        ],
        out_specs=(
            pl.BlockSpec((tb, HIDDEN_LAYER_UNITS), lambda i: (i, 0)),
            pl.BlockSpec((tb, N_CLASSES_PAD), lambda i: (i, 0)),
        ),
        out_shape=(
            jax.ShapeDtypeStruct((b, HIDDEN_LAYER_UNITS), jnp.float32),
            jax.ShapeDtypeStruct((b, N_CLASSES_PAD), jnp.float32),
        ),
        compiler_params=pltpu.CompilerParams(
            dimension_semantics=("parallel",),          # megacore sharding on v7x
            vmem_limit_bytes=32 * 1024 * 1024,          # tiles sized well under v7x/v5e limits
        ),
    )(x, params["wh"], params["bh"], params["wo"], params["bo"])

    return y, z_pad[:, :N_CLASSES]


# ------------------------------ parameters ------------------------------------
def init_params(key):
    k1, k2, k3, k4 = jax.random.split(key, 4)
    wh = jax.random.normal(k1, (TFIDF_DIM, HIDDEN_LAYER_UNITS), jnp.float32) * 0.02
    bh = jax.random.normal(k2, (1, HIDDEN_LAYER_UNITS), jnp.float32) * 0.02
    wo = jax.random.normal(k3, (HIDDEN_LAYER_UNITS, N_CLASSES), jnp.float32) * 0.02
    bo = jax.random.normal(k4, (1, N_CLASSES), jnp.float32) * 0.02

    # Lane-dense output head: pad wo with zero columns, bo with -1e30 so the
    # padded logits contribute nothing to the softmax.
    wo_pad = jnp.zeros((HIDDEN_LAYER_UNITS, N_CLASSES_PAD), jnp.float32)
    wo_pad = wo_pad.at[:, :N_CLASSES].set(wo)
    bo_pad = jnp.full((1, N_CLASSES_PAD), NEG_INF, jnp.float32)
    bo_pad = bo_pad.at[:, :N_CLASSES].set(bo)

    params = {
        "wh": wh.astype(jnp.bfloat16),        # unpadded K; kernel handles 2255
        "bh": bh,
        "wo": wo_pad.astype(jnp.bfloat16),
        "bo": bo_pad,
    }
    ref_weights = (wh, bh, wo, bo)            # f32 originals for correctness check
    return params, ref_weights


def tfidf_nn_reference(wh, bh, wo, bo, x):
    """Pure-JAX f32 reference of the PyTorch module (eval mode)."""
    y = jnp.tanh(x @ wh + bh)
    z = jax.nn.softmax(y @ wo + bo, axis=1)
    return y, z


# ---------------------------------- main --------------------------------------
if __name__ == "__main__":
    root = jax.random.PRNGKey(0)
    kp, kx = jax.random.split(root)

    params, (wh, bh, wo, bo) = init_params(kp)

    B = 2
    x = jax.random.uniform(kx, (B, TFIDF_DIM), jnp.float32)

    y, z = tfidf_nn_forward(params, x)
    y, z = jax.block_until_ready((y, z))

    assert y.shape == (B, HIDDEN_LAYER_UNITS), y.shape
    assert z.shape == (B, N_CLASSES), z.shape

    # Check against the f32 reference (tolerances cover bf16 weights/x cast).
    y_ref, z_ref = tfidf_nn_reference(wh, bh, wo, bo, x)
    row_sums = jnp.sum(z, axis=1)
    assert bool(jnp.all(jnp.abs(row_sums - 1.0) < 1e-3)), row_sums
    assert bool(jnp.max(jnp.abs(y - y_ref)) < 3e-2), jnp.max(jnp.abs(y - y_ref))
    assert bool(jnp.max(jnp.abs(z - z_ref)) < 3e-2), jnp.max(jnp.abs(z - z_ref))

    print("KERNEL_OK")
</pallas_src>

<mosaic_0001>
module attributes {stable_mosaic.version = 11 : i64} {
  func.func @_tfidf_nn_kernel(%arg0: i32, %arg1: memref<16x2255xf32, #tpu.memory_space<vmem>>, %arg2: memref<2255x128xbf16, #tpu.memory_space<vmem>>, %arg3: memref<1x128xf32, #tpu.memory_space<vmem>>, %arg4: memref<128x128xbf16, #tpu.memory_space<vmem>>, %arg5: memref<1x128xf32, #tpu.memory_space<vmem>>, %arg6: memref<16x128xf32, #tpu.memory_space<vmem>>, %arg7: memref<16x128xf32, #tpu.memory_space<vmem>>) attributes {dimension_semantics = [#tpu.dimension_semantics<parallel>], iteration_bounds = array<i64: 1>, scalar_prefetch = 0 : i64, scratch_operands = 0 : i64, tpu.core_type = #tpu.core_type<tc>, window_params = [{transform_indices = @transform_0, window_bounds = array<i64: 16, 2255>}, {pipeline_mode = #tpu.pipeline_mode<synchronous>, transform_indices = @transform_1, window_bounds = array<i64: 2255, 128>}, {pipeline_mode = #tpu.pipeline_mode<synchronous>, transform_indices = @transform_2, window_bounds = array<i64: 1, 128>}, {pipeline_mode = #tpu.pipeline_mode<synchronous>, transform_indices = @transform_3, window_bounds = array<i64: 128, 128>}, {pipeline_mode = #tpu.pipeline_mode<synchronous>, transform_indices = @transform_4, window_bounds = array<i64: 1, 128>}, {transform_indices = @transform_5, window_bounds = array<i64: 16, 128>}, {transform_indices = @transform_6, window_bounds = array<i64: 16, 128>}]} {
    %c0 = arith.constant 0 : index
    %c0_0 = arith.constant 0 : index
    %0 = vector.load %arg1[%c0, %c0_0] : memref<16x2255xf32, #tpu.memory_space<vmem>>, vector<16x2255xf32>
    %1 = arith.truncf %0 : vector<16x2255xf32> to vector<16x2255xbf16>
    %c0_1 = arith.constant 0 : index
    %c0_2 = arith.constant 0 : index
    %2 = vector.load %arg2[%c0_1, %c0_2] : memref<2255x128xbf16, #tpu.memory_space<vmem>>, vector<2255x128xbf16>
    %cst = arith.constant dense<0.000000e+00> : vector<16x128xf32>
    %3 = tpu.matmul %1, %2, %cst {dimension_numbers = #tpu.dot_dimension_numbers<[1], [0], [0], [1], [0, 0, 1, 1], [], []>} : vector<16x2255xbf16>, vector<2255x128xbf16>, vector<16x128xf32> -> vector<16x128xf32>
    %c0_3 = arith.constant 0 : index
    %c0_4 = arith.constant 0 : index
    %4 = vector.load %arg3[%c0_3, %c0_4] : memref<1x128xf32, #tpu.memory_space<vmem>>, vector<1x128xf32>
    %5 = vector.broadcast %4 : vector<1x128xf32> to vector<16x128xf32>
    %6 = arith.addf %3, %5 : vector<16x128xf32>
    %7 = math.tanh %6 : vector<16x128xf32>
    %c0_5 = arith.constant 0 : index
    %c0_6 = arith.constant 0 : index
    %8 = vector.load %arg6[%c0_5, %c0_6] : memref<16x128xf32, #tpu.memory_space<vmem>>, vector<16x128xf32>
    tpu.vector_store %arg6[%c0_5, %c0_6], %7 {strides = array<i32>} : memref<16x128xf32, #tpu.memory_space<vmem>>, vector<16x128xf32>,
    %9 = arith.truncf %7 : vector<16x128xf32> to vector<16x128xbf16>
    %c0_7 = arith.constant 0 : index
    %c0_8 = arith.constant 0 : index
    %10 = vector.load %arg4[%c0_7, %c0_8] : memref<128x128xbf16, #tpu.memory_space<vmem>>, vector<128x128xbf16>
    %cst_9 = arith.constant dense<0.000000e+00> : vector<16x128xf32>
    %11 = tpu.matmul %9, %10, %cst_9 {dimension_numbers = #tpu.dot_dimension_numbers<[1], [0], [0], [1], [0, 0, 1, 1], [], []>} : vector<16x128xbf16>, vector<128x128xbf16>, vector<16x128xf32> -> vector<16x128xf32>
    %c0_10 = arith.constant 0 : index
    %c0_11 = arith.constant 0 : index
    %12 = vector.load %arg5[%c0_10, %c0_11] : memref<1x128xf32, #tpu.memory_space<vmem>>, vector<1x128xf32>
    %13 = vector.broadcast %12 : vector<1x128xf32> to vector<16x128xf32>
    %14 = arith.addf %11, %13 : vector<16x128xf32>
    %cst_12 = arith.constant dense<0xFF800000> : vector<16xf32>
    %15 = vector.multi_reduction <maximumf>, %14, %cst_12 [1] : vector<16x128xf32> to vector<16xf32>
    %16 = vector.shape_cast %15 : vector<16xf32> to vector<16x1xf32>
    %17 = vector.broadcast %16 : vector<16x1xf32> to vector<16x128xf32>
    %18 = arith.subf %14, %17 : vector<16x128xf32>
    %19 = math.exp %18 : vector<16x128xf32>
    %cst_13 = arith.constant dense<0.000000e+00> : vector<16xf32>
    %20 = vector.multi_reduction <add>, %19, %cst_13 [1] : vector<16x128xf32> to vector<16xf32>
    %21 = vector.shape_cast %20 : vector<16xf32> to vector<16x1xf32>
    %22 = vector.broadcast %21 : vector<16x1xf32> to vector<16x128xf32>
    %23 = arith.divf %19, %22 : vector<16x128xf32>
    %c0_14 = arith.constant 0 : index
    %c0_15 = arith.constant 0 : index
    %24 = vector.load %arg7[%c0_14, %c0_15] : memref<16x128xf32, #tpu.memory_space<vmem>>, vector<16x128xf32>
    tpu.vector_store %arg7[%c0_14, %c0_15], %23 {strides = array<i32>} : memref<16x128xf32, #tpu.memory_space<vmem>>, vector<16x128xf32>,
    return
  }
  func.func @transform_0(%arg0: i32) -> (i32, i32) {
    %c0_i32 = arith.constant 0 : i32
    %c0_i32_0 = arith.constant 0 : i32
    return %arg0, %c0_i32 : i32, i32
  }
  func.func @transform_1(%arg0: i32) -> (i32, i32) {
    %c0_i32 = arith.constant 0 : i32
    %c0_i32_0 = arith.constant 0 : i32
    %c0_i32_1 = arith.constant 0 : i32
    return %c0_i32, %c0_i32_0 : i32, i32
  }
  func.func @transform_2(%arg0: i32) -> (i32, i32) {
    %c0_i32 = arith.constant 0 : i32
    %c0_i32_0 = arith.constant 0 : i32
    %c0_i32_1 = arith.constant 0 : i32
    return %c0_i32, %c0_i32_0 : i32, i32
  }
  func.func @transform_3(%arg0: i32) -> (i32, i32) {
    %c0_i32 = arith.constant 0 : i32
    %c0_i32_0 = arith.constant 0 : i32
    %c0_i32_1 = arith.constant 0 : i32
    return %c0_i32, %c0_i32_0 : i32, i32
  }
  func.func @transform_4(%arg0: i32) -> (i32, i32) {
    %c0_i32 = arith.constant 0 : i32
    %c0_i32_0 = arith.constant 0 : i32
    %c0_i32_1 = arith.constant 0 : i32
    return %c0_i32, %c0_i32_0 : i32, i32
  }
  func.func @transform_5(%arg0: i32) -> (i32, i32) {
    %c0_i32 = arith.constant 0 : i32
    %c0_i32_0 = arith.constant 0 : i32
    return %arg0, %c0_i32 : i32, i32
  }
  func.func @transform_6(%arg0: i32) -> (i32, i32) {
    %c0_i32 = arith.constant 0 : i32
    %c0_i32_0 = arith.constant 0 : i32
    return %arg0, %c0_i32 : i32, i32
  }
}

</mosaic_0001>

<llo_original>
// kernel: tfidf_nn_forward.1
$region0: #{tfidf_nn_forward.1}
  #allocation0 [shape = 'u32[]', space=smem, size = 0x4, offset = 0x4, fixed_abs, tag = 'smem constant byte address 0x4 - core index']
  #allocation1 [shape = 'u32[144,128]{1,0:T(1,128)}', space=vmem, size = 0x12000, scoped, tag = 'internal scratch']
  %s0 = inlined_call_operand.hbm [shape: f32[2,2255], index: 0, kind: input, shape index: {}]
  %s1 = inlined_call_operand.hbm [shape: bf16[2255,128], index: 1, kind: input, shape index: {}]
  %s2 = inlined_call_operand.hbm [shape: f32[1,128], index: 2, kind: input, shape index: {}]
  %s3 = inlined_call_operand.hbm [shape: bf16[128,128], index: 3, kind: input, shape index: {}]
  %s4 = inlined_call_operand.vmem [shape: f32[1,128], index: 4, kind: input, shape index: {}]
  %s5 = inlined_call_operand.hbm [shape: f32[2,128], index: 5, kind: output, shape index: {0}]
  %s6 = inlined_call_operand.hbm [shape: f32[2,128], index: 6, kind: output, shape index: {1}]
  %7 = xla_tuple %s5, %s6
  %s8 = sld [smem:[#allocation0]]
  $region54: #{tfidf_nn_forward.1} parent=0
    _
  %s10 = ssub.s32 1, %s8
  %s11 = scalar_select 0, %s10, %s8
  $region1: #{tfidf_nn_forward.1} parent=0
    #allocation2 [shape = 'u8[147456]{0}', space=vmem, size = 0x24000, scoped, tag = 'input window, operand 0, single buffered']
    #allocation3 [shape = 's32[1]{0}', space=sflag, size = 0x4, scoped, tag = 'scoped memory for tfidf_nn_forward.1']
    #allocation4 [shape = 's32[1]{0}', space=sflag, size = 0x4, scoped, tag = 'scoped memory for tfidf_nn_forward.1']
    #allocation5 [shape = 'u8[577536]{0}', space=vmem, size = 0x8d000, scoped, tag = 'input window, operand 1, single buffered']
    #allocation6 [shape = 's32[1]{0}', space=sflag, size = 0x4, scoped, tag = 'scoped memory for tfidf_nn_forward.1']
    #allocation7 [shape = 'u8[512]{0}', space=vmem, size = 0x400, scoped, tag = 'input window, operand 2, single buffered']
    #allocation8 [shape = 'u8[32768]{0}', space=vmem, size = 0x8000, scoped, tag = 'input window, operand 3, single buffered']
    #allocation9 [shape = 's32[1]{0}', space=sflag, size = 0x4, scoped, tag = 'scoped memory for tfidf_nn_forward.1']
    #allocation10 [shape = 'u8[8192]{0}', space=vmem, size = 0x2000, scoped, tag = 'output window, operand 0, single buffered']
    #allocation11 [shape = 'u8[8192]{0}', space=vmem, size = 0x2000, scoped, tag = 'output window, operand 1, single buffered']
    #allocation12 [shape = 's32[1]{0}', space=sflag, size = 0x4, scoped, tag = 'scoped memory for tfidf_nn_forward.1']
    %12 = vsyncpa [#allocation3], 0
    %13 = vsyncpa [#allocation6], 0
    %14 = vsyncpa [#allocation9], 0
    %15 = vsyncpa [#allocation4], 0
    %16 = vsyncpa [#allocation12], 0
    // Predicated region
    $region2: #{tfidf_nn_forward.1} parent=1 // pred_check
      _
    $region3: #{tfidf_nn_forward.1} parent=1 // pred_check_branch
      %18 = sbr.rel (0) target = $region5
    $region4: #{tfidf_nn_forward.1} parent=1 // pred_region
      %s20 = ssub.s32 4608, 576
      %21 = vsyncadd [#allocation3], %s20
      %s22 = sshll.u32 [#allocation2], 4
      %s23 = int_to_ptr.vmem [resolvable:$true] %s22
      %28 = dma.hbm_to_vmem [thread:$0]  %s0, 576, %s23, [#allocation3], 576, 576, 36
    $region5: #{tfidf_nn_forward.1} parent=1 // pred_fallthru
      _
    // Predicated region
    $region6: #{tfidf_nn_forward.1} parent=1 // pred_check
      _
    $region7: #{tfidf_nn_forward.1} parent=1 // pred_check_branch
      %30 = sbr.rel (0) target = $region9
    $region8: #{tfidf_nn_forward.1} parent=1 // pred_region
      %s32 = ssub.s32 18048, 18048
      %33 = vsyncadd [#allocation6], %s32
      %s34 = sshll.u32 [#allocation5], 4
      %s35 = int_to_ptr.vmem [resolvable:$true] %s34
      %40 = dma.hbm_to_vmem [thread:$0]  %s1, 18048, %s35, [#allocation6], 64, 64, 4
    $region9: #{tfidf_nn_forward.1} parent=1 // pred_fallthru
      _
    // Predicated region
    $region10: #{tfidf_nn_forward.1} parent=1 // pred_check
      _
    $region11: #{tfidf_nn_forward.1} parent=1 // pred_check_branch
      %42 = sbr.rel (0) target = $region13
    $region12: #{tfidf_nn_forward.1} parent=1 // pred_region
      %s44 = ssub.s32 16, 16
      %45 = vsyncadd [#allocation6], %s44
      %s47 = sshll.u32 [#allocation7], 4
      %s48 = int_to_ptr.vmem [resolvable:$true] %s47
      %50 = dma.hbm_to_vmem [thread:$0]  %s2, 16, %s48, [#allocation6]
    $region13: #{tfidf_nn_forward.1} parent=1 // pred_fallthru
      _
    // Predicated region
    $region14: #{tfidf_nn_forward.1} parent=1 // pred_check
      _
    $region15: #{tfidf_nn_forward.1} parent=1 // pred_check_branch
      %52 = sbr.rel (0) target = $region17
    $region16: #{tfidf_nn_forward.1} parent=1 // pred_region
      %s54 = ssub.s32 1024, 1024
      %55 = vsyncadd [#allocation9], %s54
      %s56 = sshll.u32 [#allocation8], 4
      %s57 = int_to_ptr.vmem [resolvable:$true] %s56
      %62 = dma.hbm_to_vmem [thread:$0]  %s3, 1024, %s57, [#allocation9], 64, 64, 4
    $region17: #{tfidf_nn_forward.1} parent=1 // pred_fallthru
      _
    // Predicated region
    $region18: #{tfidf_nn_forward.1} parent=1 // pred_check
      _
    $region19: #{tfidf_nn_forward.1} parent=1 // pred_check_branch
      %64 = sbr.rel (0) target = $region21
    $region20: #{tfidf_nn_forward.1} parent=1 // pred_region
      _
    $region21: #{tfidf_nn_forward.1} parent=1 // pred_fallthru
      _
    // Predicated region
    $region22: #{tfidf_nn_forward.1} parent=1 // pred_check
      _
    $region23: #{tfidf_nn_forward.1} parent=1 // pred_check_branch
      %66 = sbr.rel (0) target = $region25
    $region24: #{tfidf_nn_forward.1} parent=1 // pred_region
      %67 = dma.done [#allocation3], 4608
    $region25: #{tfidf_nn_forward.1} parent=1 // pred_fallthru
      _
    // Predicated region
    $region26: #{tfidf_nn_forward.1} parent=1 // pred_check
      _
    $region27: #{tfidf_nn_forward.1} parent=1 // pred_check_branch
      %69 = sbr.rel (0) target = $region29
    $region28: #{tfidf_nn_forward.1} parent=1 // pred_region
      %70 = dma.done [#allocation6], 18048
    $region29: #{tfidf_nn_forward.1} parent=1 // pred_fallthru
      _
    // Predicated region
    $region30: #{tfidf_nn_forward.1} parent=1 // pred_check
      _
    $region31: #{tfidf_nn_forward.1} parent=1 // pred_check_branch
      %72 = sbr.rel (0) target = $region33
    $region32: #{tfidf_nn_forward.1} parent=1 // pred_region
      %73 = dma.done [#allocation6], 16
    $region33: #{tfidf_nn_forward.1} parent=1 // pred_fallthru
      _
    // Predicated region
    $region34: #{tfidf_nn_forward.1} parent=1 // pred_check
      _
    $region35: #{tfidf_nn_forward.1} parent=1 // pred_check_branch
      %75 = sbr.rel (0) target = $region37
    $region36: #{tfidf_nn_forward.1} parent=1 // pred_region
      %76 = dma.done [#allocation9], 1024
    $region37: #{tfidf_nn_forward.1} parent=1 // pred_fallthru
      _
    %v78 = vld [vmem:[#allocation2] sm:$0xff]
    %v79 = vld [vmem:[#allocation2 + $0x8] sm:$0xff]
    %v80 = vld [vmem:[#allocation2 + $0x10] sm:$0xff]
    %v81 = vld [vmem:[#allocation2 + $0x18] sm:$0xff]
    %v82 = vld [vmem:[#allocation2 + $0x20] sm:$0xf]
    %v83 = vld [vmem:[#allocation2 + $0x24] sm:$0xff]
    %v84 = vld [vmem:[#allocation2 + $0x2c] sm:$0xff]
    %v85 = vld [vmem:[#allocation2 + $0x34] sm:$0xff]
    %v86 = vld [vmem:[#allocation2 + $0x3c] sm:$0xff]
    %v87 = vld [vmem:[#allocation2 + $0x44] sm:$0xf]
    %v88 = vld [vmem:[#allocation2 + $0x48] sm:$0xff]
    %v89 = vld [vmem:[#allocation2 + $0x50] sm:$0xff]
    %v90 = vld [vmem:[#allocation2 + $0x58] sm:$0xff]
    %v91 = vld [vmem:[#allocation2 + $0x60] sm:$0xff]
    %v92 = vld [vmem:[#allocation2 + $0x68] sm:$0xf]
    %v93 = vld [vmem:[#allocation2 + $0x6c] sm:$0xff]
    %v94 = vld [vmem:[#allocation2 + $0x74] sm:$0xff]
    %v95 = vld [vmem:[#allocation2 + $0x7c] sm:$0xff]
    %v96 = vld [vmem:[#allocation2 + $0x84] sm:$0xff]
    %v97 = vld [vmem:[#allocation2 + $0x8c] sm:$0xf]
    %v98 = vld [vmem:[#allocation2 + $0x90] sm:$0xff]
    %v99 = vld [vmem:[#allocation2 + $0x98] sm:$0xff]
    %v100 = vld [vmem:[#allocation2 + $0xa0] sm:$0xff]
    %v101 = vld [vmem:[#allocation2 + $0xa8] sm:$0xff]
    %v102 = vld [vmem:[#allocation2 + $0xb0] sm:$0xf]
    %v103 = vld [vmem:[#allocation2 + $0xb4] sm:$0xff]
    %v104 = vld [vmem:[#allocation2 + $0xbc] sm:$0xff]
    %v105 = vld [vmem:[#allocation2 + $0xc4] sm:$0xff]
    %v106 = vld [vmem:[#allocation2 + $0xcc] sm:$0xff]
    %v107 = vld [vmem:[#allocation2 + $0xd4] sm:$0xf]
    %v108 = vld [vmem:[#allocation2 + $0xd8] sm:$0xff]
    %v109 = vld [vmem:[#allocation2 + $0xe0] sm:$0xff]
    %v110 = vld [vmem:[#allocation2 + $0xe8] sm:$0xff]
    %v111 = vld [vmem:[#allocation2 + $0xf0] sm:$0xff]
    %v112 = vld [vmem:[#allocation2 + $0xf8] sm:$0xf]
    %v113 = vld [vmem:[#allocation2 + $0xfc] sm:$0xff]
    %v114 = vld [vmem:[#allocation2 + $0x104] sm:$0xff]
    %v115 = vld [vmem:[#allocation2 + $0x10c] sm:$0xff]
    %v116 = vld [vmem:[#allocation2 + $0x114] sm:$0xff]
    %v117 = vld [vmem:[#allocation2 + $0x11c] sm:$0xf]
    %v158 = vcombine.low %v78, %v83
    %v159 = vcombine.high %v78, %v83
    %v160 = vcombine.low %v88, %v93
    %v161 = vcombine.high %v88, %v93
    %v163 = vunpack.c.l.s4 1983009808
    %v164 = vunpack.c.0.s8 %v163
    %v165 = vlaneseq
    %v166 = vshrl.u32 %v165, 7
    %v167 = vsub.s32 %v164, %v166
    %v168 = vrot.slane %v158, %v167
    %v170 = vunpack.c.l.s4 1983009808
    %v171 = vunpack.c.0.s8 %v170
    %v172 = vlaneseq
    %v173 = vshrl.u32 %v172, 7
    %v174 = vsub.s32 %v171, %v173
    %v175 = vrot.slane %v159, %v174
    %v177 = vunpack.c.l.s4 1983009808
    %v178 = vunpack.c.0.s8 %v177
    %v179 = vlaneseq
    %v180 = vshrl.u32 %v179, 7
    %v181 = vsub.s32 %v178, %v180
    %v182 = vrot.slane %v160, %v181
    %v184 = vunpack.c.l.s4 1983009808
    %v185 = vunpack.c.0.s8 %v184
    %v186 = vlaneseq
    %v187 = vshrl.u32 %v186, 7
    %v188 = vsub.s32 %v185, %v187
    %v189 = vrot.slane %v161, %v188
    %v190 = vcombine.low %v168, %v182
    %v191 = vcombine.high %v168, %v182
    %v192 = vcombine.low %v175, %v189
    %v193 = vcombine.high %v175, %v189
    %v194 = vcombine.low %v79, %v84
    %v195 = vcombine.high %v79, %v84
    %v196 = vcombine.low %v89, %v94
    %v197 = vcombine.high %v89, %v94
    %v199 = vunpack.c.l.s4 1983009808
    %v200 = vunpack.c.0.s8 %v199
    %v201 = vlaneseq
    %v202 = vshrl.u32 %v201, 7
    %v203 = vsub.s32 %v200, %v202
    %v204 = vrot.slane %v194, %v203
    %v206 = vunpack.c.l.s4 1983009808
    %v207 = vunpack.c.0.s8 %v206
    %v208 = vlaneseq
    %v209 = vshrl.u32 %v208, 7
    %v210 = vsub.s32 %v207, %v209
    %v211 = vrot.slane %v195, %v210
    %v213 = vunpack.c.l.s4 1983009808
    %v214 = vunpack.c.0.s8 %v213
    %v215 = vlaneseq
    %v216 = vshrl.u32 %v215, 7
    %v217 = vsub.s32 %v214, %v216
    %v218 = vrot.slane %v196, %v217
    %v220 = vunpack.c.l.s4 1983009808
    %v221 = vunpack.c.0.s8 %v220
    %v222 = vlaneseq
    %v223 = vshrl.u32 %v222, 7
    %v224 = vsub.s32 %v221, %v223
    %v225 = vrot.slane %v197, %v224
    %v226 = vcombine.low %v204, %v218
    %v227 = vcombine.high %v204, %v218
    %v228 = vcombine.low %v211, %v225
    %v229 = vcombine.high %v211, %v225
    %v230 = vcombine.low %v80, %v85
    %v231 = vcombine.high %v80, %v85
    %v232 = vcombine.low %v90, %v95
    %v233 = vcombine.high %v90, %v95
    %v235 = vunpack.c.l.s4 1983009808
    %v236 = vunpack.c.0.s8 %v235
    %v237 = vlaneseq
    %v238 = vshrl.u32 %v237, 7
    %v239 = vsub.s32 %v236, %v238
    %v240 = vrot.slane %v230, %v239
    %v242 = vunpack.c.l.s4 1983009808
    %v243 = vunpack.c.0.s8 %v242
    %v244 = vlaneseq
    %v245 = vshrl.u32 %v244, 7
    %v246 = vsub.s32 %v243, %v245
    %v247 = vrot.slane %v231, %v246
    %v249 = vunpack.c.l.s4 1983009808
    %v250 = vunpack.c.0.s8 %v249
    %v251 = vlaneseq
    %v252 = vshrl.u32 %v251, 7
    %v253 = vsub.s32 %v250, %v252
    %v254 = vrot.slane %v232, %v253
    %v256 = vunpack.c.l.s4 1983009808
    %v257 = vunpack.c.0.s8 %v256
    %v258 = vlaneseq
    %v259 = vshrl.u32 %v258, 7
    %v260 = vsub.s32 %v257, %v259
    %v261 = vrot.slane %v233, %v260
    %v262 = vcombine.low %v240, %v254
    %v263 = vcombine.high %v240, %v254
    %v264 = vcombine.low %v247, %v261
    %v265 = vcombine.high %v247, %v261
    %v266 = vcombine.low %v81, %v86
    %v267 = vcombine.high %v81, %v86
    %v268 = vcombine.low %v91, %v96
    %v269 = vcombine.high %v91, %v96
    %v271 = vunpack.c.l.s4 1983009808
    %v272 = vunpack.c.0.s8 %v271
    %v273 = vlaneseq
    %v274 = vshrl.u32 %v273, 7
    %v275 = vsub.s32 %v272, %v274
    %v276 = vrot.slane %v266, %v275
    %v278 = vunpack.c.l.s4 1983009808
    %v279 = vunpack.c.0.s8 %v278
    %v280 = vlaneseq
    %v281 = vshrl.u32 %v280, 7
    %v282 = vsub.s32 %v279, %v281
    %v283 = vrot.slane %v267, %v282
    %v285 = vunpack.c.l.s4 1983009808
    %v286 = vunpack.c.0.s8 %v285
    %v287 = vlaneseq
    %v288 = vshrl.u32 %v287, 7
    %v289 = vsub.s32 %v286, %v288
    %v290 = vrot.slane %v268, %v289
    %v292 = vunpack.c.l.s4 1983009808
    %v293 = vunpack.c.0.s8 %v292
    %v294 = vlaneseq
    %v295 = vshrl.u32 %v294, 7
    %v296 = vsub.s32 %v293, %v295
    %v297 = vrot.slane %v269, %v296
    %v298 = vcombine.low %v276, %v290
    %v299 = vcombine.high %v276, %v290
    %v300 = vcombine.low %v283, %v297
    %v301 = vcombine.high %v283, %v297
    %v302 = vcombine.low %v82, %v87
    %v303 = vcombine.low %v92, %v97
    %v305 = vunpack.c.l.s4 1983009808
    %v306 = vunpack.c.0.s8 %v305
    %v307 = vlaneseq
    %v308 = vshrl.u32 %v307, 7
    %v309 = vsub.s32 %v306, %v308
    %v310 = vrot.slane %v302, %v309
    %v312 = vunpack.c.l.s4 1983009808
    %v313 = vunpack.c.0.s8 %v312
    %v314 = vlaneseq
    %v315 = vshrl.u32 %v314, 7
    %v316 = vsub.s32 %v313, %v315
    %v317 = vrot.slane %v303, %v316
    %v318 = vcombine.low %v310, %v317
    %v319 = vcombine.high %v310, %v317
    %v320 = vcombine.low %v98, %v103
    %v321 = vcombine.high %v98, %v103
    %v322 = vcombine.low %v108, %v113
    %v323 = vcombine.high %v108, %v113
    %v325 = vunpack.c.l.s4 1983009808
    %v326 = vunpack.c.0.s8 %v325
    %v327 = vlaneseq
    %v328 = vshrl.u32 %v327, 7
    %v329 = vsub.s32 %v326, %v328
    %v330 = vrot.slane %v320, %v329
    %v332 = vunpack.c.l.s4 1983009808
    %v333 = vunpack.c.0.s8 %v332
    %v334 = vlaneseq
    %v335 = vshrl.u32 %v334, 7
    %v336 = vsub.s32 %v333, %v335
    %v337 = vrot.slane %v321, %v336
    %v339 = vunpack.c.l.s4 1983009808
    %v340 = vunpack.c.0.s8 %v339
    %v341 = vlaneseq
    %v342 = vshrl.u32 %v341, 7
    %v343 = vsub.s32 %v340, %v342
    %v344 = vrot.slane %v322, %v343
    %v346 = vunpack.c.l.s4 1983009808
    %v347 = vunpack.c.0.s8 %v346
    %v348 = vlaneseq
    %v349 = vshrl.u32 %v348, 7
    %v350 = vsub.s32 %v347, %v349
    %v351 = vrot.slane %v323, %v350
    %v352 = vcombine.low %v330, %v344
    %v353 = vcombine.high %v330, %v344
    %v354 = vcombine.low %v337, %v351
    %v355 = vcombine.high %v337, %v351
    %v356 = vcombine.low %v99, %v104
    %v357 = vcombine.high %v99, %v104
    %v358 = vcombine.low %v109, %v114
    %v359 = vcombine.high %v109, %v114
    %v361 = vunpack.c.l.s4 1983009808
    %v362 = vunpack.c.0.s8 %v361
    %v363 = vlaneseq
    %v364 = vshrl.u32 %v363, 7
    %v365 = vsub.s32 %v362, %v364
    %v366 = vrot.slane %v356, %v365
    %v368 = vunpack.c.l.s4 1983009808
    %v369 = vunpack.c.0.s8 %v368
    %v370 = vlaneseq
    %v371 = vshrl.u32 %v370, 7
    %v372 = vsub.s32 %v369, %v371
    %v373 = vrot.slane %v357, %v372
    %v375 = vunpack.c.l.s4 1983009808
    %v376 = vunpack.c.0.s8 %v375
    %v377 = vlaneseq
    %v378 = vshrl.u32 %v377, 7
    %v379 = vsub.s32 %v376, %v378
    %v380 = vrot.slane %v358, %v379
    %v382 = vunpack.c.l.s4 1983009808
    %v383 = vunpack.c.0.s8 %v382
    %v384 = vlaneseq
    %v385 = vshrl.u32 %v384, 7
    %v386 = vsub.s32 %v383, %v385
    %v387 = vrot.slane %v359, %v386
    %v388 = vcombine.low %v366, %v380
    %v389 = vcombine.high %v366, %v380
    %v390 = vcombine.low %v373, %v387
    %v391 = vcombine.high %v373, %v387
    %v392 = vcombine.low %v100, %v105
    %v393 = vcombine.high %v100, %v105
    %v394 = vcombine.low %v110, %v115
    %v395 = vcombine.high %v110, %v115
    %v397 = vunpack.c.l.s4 1983009808
    %v398 = vunpack.c.0.s8 %v397
    %v399 = vlaneseq
    %v400 = vshrl.u32 %v399, 7
    %v401 = vsub.s32 %v398, %v400
    %v402 = vrot.slane %v392, %v401
    %v404 = vunpack.c.l.s4 1983009808
    %v405 = vunpack.c.0.s8 %v404
    %v406 = vlaneseq
    %v407 = vshrl.u32 %v406, 7
    %v408 = vsub.s32 %v405, %v407
    %v409 = vrot.slane %v393, %v408
    %v411 = vunpack.c.l.s4 1983009808
    %v412 = vunpack.c.0.s8 %v411
    %v413 = vlaneseq
    %v414 = vshrl.u32 %v413, 7
    %v415 = vsub.s32 %v412, %v414
    %v416 = vrot.slane %v394, %v415
    %v418 = vunpack.c.l.s4 1983009808
    %v419 = vunpack.c.0.s8 %v418
    %v420 = vlaneseq
    %v421 = vshrl.u32 %v420, 7
    %v422 = vsub.s32 %v419, %v421
    %v423 = vrot.slane %v395, %v422
    %v424 = vcombine.low %v402, %v416
    %v425 = vcombine.high %v402, %v416
    %v426 = vcombine.low %v409, %v423
    %v427 = vcombine.high %v409, %v423
    %v428 = vcombine.low %v101, %v106
    %v429 = vcombine.high %v101, %v106
    %v430 = vcombine.low %v111, %v116
    %v431 = vcombine.high %v111, %v116
    %v433 = vunpack.c.l.s4 1983009808
    %v434 = vunpack.c.0.s8 %v433
    %v435 = vlaneseq
    %v436 = vshrl.u32 %v435, 7
    %v437 = vsub.s32 %v434, %v436
    %v438 = vrot.slane %v428, %v437
    %v440 = vunpack.c.l.s4 1983009808
    %v441 = vunpack.c.0.s8 %v440
    %v442 = vlaneseq
    %v443 = vshrl.u32 %v442, 7
    %v444 = vsub.s32 %v441, %v443
    %v445 = vrot.slane %v429, %v444
    %v447 = vunpack.c.l.s4 1983009808
    %v448 = vunpack.c.0.s8 %v447
    %v449 = vlaneseq
    %v450 = vshrl.u32 %v449, 7
    %v451 = vsub.s32 %v448, %v450
    %v452 = vrot.slane %v430, %v451
    %v454 = vunpack.c.l.s4 1983009808
    %v455 = vunpack.c.0.s8 %v454
    %v456 = vlaneseq
    %v457 = vshrl.u32 %v456, 7
    %v458 = vsub.s32 %v455, %v457
    %v459 = vrot.slane %v431, %v458
    %v460 = vcombine.low %v438, %v452
    %v461 = vcombine.high %v438, %v452
    %v462 = vcombine.low %v445, %v459
    %v463 = vcombine.high %v445, %v459
    %v464 = vcombine.low %v102, %v107
    %v465 = vcombine.low %v112, %v117
    %v467 = vunpack.c.l.s4 1983009808
    %v468 = vunpack.c.0.s8 %v467
    %v469 = vlaneseq
    %v470 = vshrl.u32 %v469, 7
    %v471 = vsub.s32 %v468, %v470
    %v472 = vrot.slane %v464, %v471
    %v474 = vunpack.c.l.s4 1983009808
    %v475 = vunpack.c.0.s8 %v474
    %v476 = vlaneseq
    %v477 = vshrl.u32 %v476, 7
    %v478 = vsub.s32 %v475, %v477
    %v479 = vrot.slane %v465, %v478
    %v480 = vcombine.low %v472, %v479
    %v481 = vcombine.high %v472, %v479
    %v518 = vpack.c.bf16 %v352, %v190
    %v519 = vpack.c.bf16 %v353, %v191
    %v520 = vpack.c.bf16 %v354, %v192
    %v521 = vpack.c.bf16 %v355, %v193
    %v522 = vpack.c.bf16 %v388, %v226
    %v523 = vpack.c.bf16 %v389, %v227
    %v524 = vpack.c.bf16 %v390, %v228
    %v525 = vpack.c.bf16 %v391, %v229
    %v526 = vpack.c.bf16 %v424, %v262
    %v527 = vpack.c.bf16 %v425, %v263
    %v528 = vpack.c.bf16 %v426, %v264
    %v529 = vpack.c.bf16 %v427, %v265
    %v530 = vpack.c.bf16 %v460, %v298
    %v531 = vpack.c.bf16 %v461, %v299
    %v532 = vpack.c.bf16 %v462, %v300
    %v533 = vpack.c.bf16 %v463, %v301
    %v534 = vpack.c.bf16 %v480, %v318
    %v535 = vpack.c.bf16 %v481, %v319
    %v536 = vld [vmem:[#allocation5] sm:$0xf]
    %v537 = vld [vmem:[#allocation5 + $0x4] sm:$0xf]
    %v538 = vld [vmem:[#allocation5 + $0x8] sm:$0xf]
    %v539 = vld [vmem:[#allocation5 + $0xc] sm:$0xf]
    %v540 = vld [vmem:[#allocation5 + $0x10] sm:$0xf]
    %v541 = vld [vmem:[#allocation5 + $0x14] sm:$0xf]
    %v542 = vld [vmem:[#allocation5 + $0x18] sm:$0xf]
    %v543 = vld [vmem:[#allocation5 + $0x1c] sm:$0xf]
    %v544 = vld [vmem:[#allocation5 + $0x20] sm:$0xf]
    %v545 = vld [vmem:[#allocation5 + $0x24] sm:$0xf]
    %v546 = vld [vmem:[#allocation5 + $0x28] sm:$0xf]
    %v547 = vld [vmem:[#allocation5 + $0x2c] sm:$0xf]
    %v548 = vld [vmem:[#allocation5 + $0x30] sm:$0xf]
    %v549 = vld [vmem:[#allocation5 + $0x34] sm:$0xf]
    %v550 = vld [vmem:[#allocation5 + $0x38] sm:$0xf]
    %v551 = vld [vmem:[#allocation5 + $0x3c] sm:$0xf]
    %v552 = vld [vmem:[#allocation5 + $0x40] sm:$0xf]
    %v553 = vld [vmem:[#allocation5 + $0x44] sm:$0xf]
    %v554 = vld [vmem:[#allocation5 + $0x48] sm:$0xf]
    %v555 = vld [vmem:[#allocation5 + $0x4c] sm:$0xf]
    %v556 = vld [vmem:[#allocation5 + $0x50] sm:$0xf]
    %v557 = vld [vmem:[#allocation5 + $0x54] sm:$0xf]
    %v558 = vld [vmem:[#allocation5 + $0x58] sm:$0xf]
    %v559 = vld [vmem:[#allocation5 + $0x5c] sm:$0xf]
    %v560 = vld [vmem:[#allocation5 + $0x60] sm:$0xf]
    %v561 = vld [vmem:[#allocation5 + $0x64] sm:$0xf]
    %v562 = vld [vmem:[#allocation5 + $0x68] sm:$0xf]
    %v563 = vld [vmem:[#allocation5 + $0x6c] sm:$0xf]
    %v564 = vld [vmem:[#allocation5 + $0x70] sm:$0xf]
    %v565 = vld [vmem:[#allocation5 + $0x74] sm:$0xf]
    %v566 = vld [vmem:[#allocation5 + $0x78] sm:$0xf]
    %v567 = vld [vmem:[#allocation5 + $0x7c] sm:$0xf]
    %v568 = vld [vmem:[#allocation5 + $0x80] sm:$0xf]
    %v569 = vld [vmem:[#allocation5 + $0x84] sm:$0xf]
    %v570 = vld [vmem:[#allocation5 + $0x88] sm:$0xf]
    %v571 = vld [vmem:[#allocation5 + $0x8c] sm:$0xf]
    %v572 = vld [vmem:[#allocation5 + $0x90] sm:$0xf]
    %v573 = vld [vmem:[#allocation5 + $0x94] sm:$0xf]
    %v574 = vld [vmem:[#allocation5 + $0x98] sm:$0xf]
    %v575 = vld [vmem:[#allocation5 + $0x9c] sm:$0xf]
    %v576 = vld [vmem:[#allocation5 + $0xa0] sm:$0xf]
    %v577 = vld [vmem:[#allocation5 + $0xa4] sm:$0xf]
    %v578 = vld [vmem:[#allocation5 + $0xa8] sm:$0xf]
    %v579 = vld [vmem:[#allocation5 + $0xac] sm:$0xf]
    %v580 = vld [vmem:[#allocation5 + $0xb0] sm:$0xf]
    %v581 = vld [vmem:[#allocation5 + $0xb4] sm:$0xf]
    %v582 = vld [vmem:[#allocation5 + $0xb8] sm:$0xf]
    %v583 = vld [vmem:[#allocation5 + $0xbc] sm:$0xf]
    %v584 = vld [vmem:[#allocation5 + $0xc0] sm:$0xf]
    %v585 = vld [vmem:[#allocation5 + $0xc4] sm:$0xf]
    %v586 = vld [vmem:[#allocation5 + $0xc8] sm:$0xf]
    %v587 = vld [vmem:[#allocation5 + $0xcc] sm:$0xf]
    %v588 = vld [vmem:[#allocation5 + $0xd0] sm:$0xf]
    %v589 = vld [vmem:[#allocation5 + $0xd4] sm:$0xf]
    %v590 = vld [vmem:[#allocation5 + $0xd8] sm:$0xf]
    %v591 = vld [vmem:[#allocation5 + $0xdc] sm:$0xf]
    %v592 = vld [vmem:[#allocation5 + $0xe0] sm:$0xf]
    %v593 = vld [vmem:[#allocation5 + $0xe4] sm:$0xf]
    %v594 = vld [vmem:[#allocation5 + $0xe8] sm:$0xf]
    %v595 = vld [vmem:[#allocation5 + $0xec] sm:$0xf]
    %v596 = vld [vmem:[#allocation5 + $0xf0] sm:$0xf]
    %v597 = vld [vmem:[#allocation5 + $0xf4] sm:$0xf]
    %v598 = vld [vmem:[#allocation5 + $0xf8] sm:$0xf]
    %v599 = vld [vmem:[#allocation5 + $0xfc] sm:$0xf]
    %v600 = vld [vmem:[#allocation5 + $0x100] sm:$0xf]
    %v601 = vld [vmem:[#allocation5 + $0x104] sm:$0xf]
    %v602 = vld [vmem:[#allocation5 + $0x108] sm:$0xf]
    %v603 = vld [vmem:[#allocation5 + $0x10c] sm:$0xf]
    %v604 = vld [vmem:[#allocation5 + $0x110] sm:$0xf]
    %v605 = vld [vmem:[#allocation5 + $0x114] sm:$0xf]
    %v606 = vld [vmem:[#allocation5 + $0x118] sm:$0xf]
    %v607 = vld [vmem:[#allocation5 + $0x11c] sm:$0xf]
    %v608 = vld [vmem:[#allocation5 + $0x120] sm:$0xf]
    %v609 = vld [vmem:[#allocation5 + $0x124] sm:$0xf]
    %v610 = vld [vmem:[#allocation5 + $0x128] sm:$0xf]
    %v611 = vld [vmem:[#allocation5 + $0x12c] sm:$0xf]
    %v612 = vld [vmem:[#allocation5 + $0x130] sm:$0xf]
    %v613 = vld [vmem:[#allocation5 + $0x134] sm:$0xf]
    %v614 = vld [vmem:[#allocation5 + $0x138] sm:$0xf]
    %v615 = vld [vmem:[#allocation5 + $0x13c] sm:$0xf]
    %v616 = vld [vmem:[#allocation5 + $0x140] sm:$0xf]
    %v617 = vld [vmem:[#allocation5 + $0x144] sm:$0xf]
    %v618 = vld [vmem:[#allocation5 + $0x148] sm:$0xf]
    %v619 = vld [vmem:[#allocation5 + $0x14c] sm:$0xf]
    %v620 = vld [vmem:[#allocation5 + $0x150] sm:$0xf]
    %v621 = vld [vmem:[#allocation5 + $0x154] sm:$0xf]
    %v622 = vld [vmem:[#allocation5 + $0x158] sm:$0xf]
    %v623 = vld [vmem:[#allocation5 + $0x15c] sm:$0xf]
    %v624 = vld [vmem:[#allocation5 + $0x160] sm:$0xf]
    %v625 = vld [vmem:[#allocation5 + $0x164] sm:$0xf]
    %v626 = vld [vmem:[#allocation5 + $0x168] sm:$0xf]
    %v627 = vld [vmem:[#allocation5 + $0x16c] sm:$0xf]
    %v628 = vld [vmem:[#allocation5 + $0x170] sm:$0xf]
    %v629 = vld [vmem:[#allocation5 + $0x174] sm:$0xf]
    %v630 = vld [vmem:[#allocation5 + $0x178] sm:$0xf]
    %v631 = vld [vmem:[#allocation5 + $0x17c] sm:$0xf]
    %v632 = vld [vmem:[#allocation5 + $0x180] sm:$0xf]
    %v633 = vld [vmem:[#allocation5 + $0x184] sm:$0xf]
    %v634 = vld [vmem:[#allocation5 + $0x188] sm:$0xf]
    %v635 = vld [vmem:[#allocation5 + $0x18c] sm:$0xf]
    %v636 = vld [vmem:[#allocation5 + $0x190] sm:$0xf]
    %v637 = vld [vmem:[#allocation5 + $0x194] sm:$0xf]
    %v638 = vld [vmem:[#allocation5 + $0x198] sm:$0xf]
    %v639 = vld [vmem:[#allocation5 + $0x19c] sm:$0xf]
    %v640 = vld [vmem:[#allocation5 + $0x1a0] sm:$0xf]
    %v641 = vld [vmem:[#allocation5 + $0x1a4] sm:$0xf]
    %v642 = vld [vmem:[#allocation5 + $0x1a8] sm:$0xf]
    %v643 = vld [vmem:[#allocation5 + $0x1ac] sm:$0xf]
    %v644 = vld [vmem:[#allocation5 + $0x1b0] sm:$0xf]
    %v645 = vld [vmem:[#allocation5 + $0x1b4] sm:$0xf]
    %v646 = vld [vmem:[#allocation5 + $0x1b8] sm:$0xf]
    %v647 = vld [vmem:[#allocation5 + $0x1bc] sm:$0xf]
    %v648 = vld [vmem:[#allocation5 + $0x1c0] sm:$0xf]
    %v649 = vld [vmem:[#allocation5 + $0x1c4] sm:$0xf]
    %v650 = vld [vmem:[#allocation5 + $0x1c8] sm:$0xf]
    %v651 = vld [vmem:[#allocation5 + $0x1cc] sm:$0xf]
    %v652 = vld [vmem:[#allocation5 + $0x1d0] sm:$0xf]
    %v653 = vld [vmem:[#allocation5 + $0x1d4] sm:$0xf]
    %v654 = vld [vmem:[#allocation5 + $0x1d8] sm:$0xf]
    %v655 = vld [vmem:[#allocation5 + $0x1dc] sm:$0xf]
    %v656 = vld [vmem:[#allocation5 + $0x1e0] sm:$0xf]
    %v657 = vld [vmem:[#allocation5 + $0x1e4] sm:$0xf]
    %v658 = vld [vmem:[#allocation5 + $0x1e8] sm:$0xf]
    %v659 = vld [vmem:[#allocation5 + $0x1ec] sm:$0xf]
    %v660 = vld [vmem:[#allocation5 + $0x1f0] sm:$0xf]
    %v661 = vld [vmem:[#allocation5 + $0x1f4] sm:$0xf]
    %v662 = vld [vmem:[#allocation5 + $0x1f8] sm:$0xf]
    %v663 = vld [vmem:[#allocation5 + $0x1fc] sm:$0xf]
    %v664 = vld [vmem:[#allocation5 + $0x200] sm:$0xf]
    %v665 = vld [vmem:[#allocation5 + $0x204] sm:$0xf]
    %v666 = vld [vmem:[#allocation5 + $0x208] sm:$0xf]
    %v667 = vld [vmem:[#allocation5 + $0x20c] sm:$0xf]
    %v668 = vld [vmem:[#allocation5 + $0x210] sm:$0xf]
    %v669 = vld [vmem:[#allocation5 + $0x214] sm:$0xf]
    %v670 = vld [vmem:[#allocation5 + $0x218] sm:$0xf]
    %v671 = vld [vmem:[#allocation5 + $0x21c] sm:$0xf]
    %v672 = vld [vmem:[#allocation5 + $0x220] sm:$0xf]
    %v673 = vld [vmem:[#allocation5 + $0x224] sm:$0xf]
    %v674 = vld [vmem:[#allocation5 + $0x228] sm:$0xf]
    %v675 = vld [vmem:[#allocation5 + $0x22c] sm:$0xf]
    %v676 = vld [vmem:[#allocation5 + $0x230] sm:$0xf]
    %v677 = vld [vmem:[#allocation5 + $0x234] sm:$0xf]
    %v678 = vld [vmem:[#allocation5 + $0x238] sm:$0xf]
    %v679 = vld [vmem:[#allocation5 + $0x23c] sm:$0xf]
    %v680 = vld [vmem:[#allocation5 + $0x240] sm:$0xf]
    %v681 = vld [vmem:[#allocation5 + $0x244] sm:$0xf]
    %v682 = vld [vmem:[#allocation5 + $0x248] sm:$0xf]
    %v683 = vld [vmem:[#allocation5 + $0x24c] sm:$0xf]
    %v684 = vld [vmem:[#allocation5 + $0x250] sm:$0xf]
    %v685 = vld [vmem:[#allocation5 + $0x254] sm:$0xf]
    %v686 = vld [vmem:[#allocation5 + $0x258] sm:$0xf]
    %v687 = vld [vmem:[#allocation5 + $0x25c] sm:$0xf]
    %v688 = vld [vmem:[#allocation5 + $0x260] sm:$0xf]
    %v689 = vld [vmem:[#allocation5 + $0x264] sm:$0xf]
    %v690 = vld [vmem:[#allocation5 + $0x268] sm:$0xf]
    %v691 = vld [vmem:[#allocation5 + $0x26c] sm:$0xf]
    %v692 = vld [vmem:[#allocation5 + $0x270] sm:$0xf]
    %v693 = vld [vmem:[#allocation5 + $0x274] sm:$0xf]
    %v694 = vld [vmem:[#allocation5 + $0x278] sm:$0xf]
    %v695 = vld [vmem:[#allocation5 + $0x27c] sm:$0xf]
    %v696 = vld [vmem:[#allocation5 + $0x280] sm:$0xf]
    %v697 = vld [vmem:[#allocation5 + $0x284] sm:$0xf]
    %v698 = vld [vmem:[#allocation5 + $0x288] sm:$0xf]
    %v699 = vld [vmem:[#allocation5 + $0x28c] sm:$0xf]
    %v700 = vld [vmem:[#allocation5 + $0x290] sm:$0xf]
    %v701 = vld [vmem:[#allocation5 + $0x294] sm:$0xf]
    %v702 = vld [vmem:[#allocation5 + $0x298] sm:$0xf]
    %v703 = vld [vmem:[#allocation5 + $0x29c] sm:$0xf]
    %v704 = vld [vmem:[#allocation5 + $0x2a0] sm:$0xf]
    %v705 = vld [vmem:[#allocation5 + $0x2a4] sm:$0xf]
    %v706 = vld [vmem:[#allocation5 + $0x2a8] sm:$0xf]
    %v707 = vld [vmem:[#allocation5 + $0x2ac] sm:$0xf]
    %v708 = vld [vmem:[#allocation5 + $0x2b0] sm:$0xf]
    %v709 = vld [vmem:[#allocation5 + $0x2b4] sm:$0xf]
    %v710 = vld [vmem:[#allocation5 + $0x2b8] sm:$0xf]
    %v711 = vld [vmem:[#allocation5 + $0x2bc] sm:$0xf]
    %v712 = vld [vmem:[#allocation5 + $0x2c0] sm:$0xf]
    %v713 = vld [vmem:[#allocation5 + $0x2c4] sm:$0xf]
    %v714 = vld [vmem:[#allocation5 + $0x2c8] sm:$0xf]
    %v715 = vld [vmem:[#allocation5 + $0x2cc] sm:$0xf]
    %v716 = vld [vmem:[#allocation5 + $0x2d0] sm:$0xf]
    %v717 = vld [vmem:[#allocation5 + $0x2d4] sm:$0xf]
    %v718 = vld [vmem:[#allocation5 + $0x2d8] sm:$0xf]
    %v719 = vld [vmem:[#allocation5 + $0x2dc] sm:$0xf]
    %v720 = vld [vmem:[#allocation5 + $0x2e0] sm:$0xf]
    %v721 = vld [vmem:[#allocation5 + $0x2e4] sm:$0xf]
    %v722 = vld [vmem:[#allocation5 + $0x2e8] sm:$0xf]
    %v723 = vld [vmem:[#allocation5 + $0x2ec] sm:$0xf]
    %v724 = vld [vmem:[#allocation5 + $0x2f0] sm:$0xf]
    %v725 = vld [vmem:[#allocation5 + $0x2f4] sm:$0xf]
    %v726 = vld [vmem:[#allocation5 + $0x2f8] sm:$0xf]
    %v727 = vld [vmem:[#allocation5 + $0x2fc] sm:$0xf]
    %v728 = vld [vmem:[#allocation5 + $0x300] sm:$0xf]
    %v729 = vld [vmem:[#allocation5 + $0x304] sm:$0xf]
    %v730 = vld [vmem:[#allocation5 + $0x308] sm:$0xf]
    %v731 = vld [vmem:[#allocation5 + $0x30c] sm:$0xf]
    %v732 = vld [vmem:[#allocation5 + $0x310] sm:$0xf]
    %v733 = vld [vmem:[#allocation5 + $0x314] sm:$0xf]
    %v734 = vld [vmem:[#allocation5 + $0x318] sm:$0xf]
    %v735 = vld [vmem:[#allocation5 + $0x31c] sm:$0xf]
    %v736 = vld [vmem:[#allocation5 + $0x320] sm:$0xf]
    %v737 = vld [vmem:[#allocation5 + $0x324] sm:$0xf]
    %v738 = vld [vmem:[#allocation5 + $0x328] sm:$0xf]
    %v739 = vld [vmem:[#allocation5 + $0x32c] sm:$0xf]
    %v740 = vld [vmem:[#allocation5 + $0x330] sm:$0xf]
    %v741 = vld [vmem:[#allocation5 + $0x334] sm:$0xf]
    %v742 = vld [vmem:[#allocation5 + $0x338] sm:$0xf]
    %v743 = vld [vmem:[#allocation5 + $0x33c] sm:$0xf]
    %v744 = vld [vmem:[#allocation5 + $0x340] sm:$0xf]
    %v745 = vld [vmem:[#allocation5 + $0x344] sm:$0xf]
    %v746 = vld [vmem:[#allocation5 + $0x348] sm:$0xf]
    %v747 = vld [vmem:[#allocation5 + $0x34c] sm:$0xf]
    %v748 = vld [vmem:[#allocation5 + $0x350] sm:$0xf]
    %v749 = vld [vmem:[#allocation5 + $0x354] sm:$0xf]
    %v750 = vld [vmem:[#allocation5 + $0x358] sm:$0xf]
    %v751 = vld [vmem:[#allocation5 + $0x35c] sm:$0xf]
    %v752 = vld [vmem:[#allocation5 + $0x360] sm:$0xf]
    %v753 = vld [vmem:[#allocation5 + $0x364] sm:$0xf]
    %v754 = vld [vmem:[#allocation5 + $0x368] sm:$0xf]
    %v755 = vld [vmem:[#allocation5 + $0x36c] sm:$0xf]
    %v756 = vld [vmem:[#allocation5 + $0x370] sm:$0xf]
    %v757 = vld [vmem:[#allocation5 + $0x374] sm:$0xf]
    %v758 = vld [vmem:[#allocation5 + $0x378] sm:$0xf]
    %v759 = vld [vmem:[#allocation5 + $0x37c] sm:$0xf]
    %v760 = vld [vmem:[#allocation5 + $0x380] sm:$0xf]
    %v761 = vld [vmem:[#allocation5 + $0x384] sm:$0xf]
    %v762 = vld [vmem:[#allocation5 + $0x388] sm:$0xf]
    %v763 = vld [vmem:[#allocation5 + $0x38c] sm:$0xf]
    %v764 = vld [vmem:[#allocation5 + $0x390] sm:$0xf]
    %v765 = vld [vmem:[#allocation5 + $0x394] sm:$0xf]
    %v766 = vld [vmem:[#allocation5 + $0x398] sm:$0xf]
    %v767 = vld [vmem:[#allocation5 + $0x39c] sm:$0xf]
    %v768 = vld [vmem:[#allocation5 + $0x3a0] sm:$0xf]
    %v769 = vld [vmem:[#allocation5 + $0x3a4] sm:$0xf]
    %v770 = vld [vmem:[#allocation5 + $0x3a8] sm:$0xf]
    %v771 = vld [vmem:[#allocation5 + $0x3ac] sm:$0xf]
    %v772 = vld [vmem:[#allocation5 + $0x3b0] sm:$0xf]
    %v773 = vld [vmem:[#allocation5 + $0x3b4] sm:$0xf]
    %v774 = vld [vmem:[#allocation5 + $0x3b8] sm:$0xf]
    %v775 = vld [vmem:[#allocation5 + $0x3bc] sm:$0xf]
    %v776 = vld [vmem:[#allocation5 + $0x3c0] sm:$0xf]
    %v777 = vld [vmem:[#allocation5 + $0x3c4] sm:$0xf]
    %v778 = vld [vmem:[#allocation5 + $0x3c8] sm:$0xf]
    %v779 = vld [vmem:[#allocation5 + $0x3cc] sm:$0xf]
    %v780 = vld [vmem:[#allocation5 + $0x3d0] sm:$0xf]
    %v781 = vld [vmem:[#allocation5 + $0x3d4] sm:$0xf]
    %v782 = vld [vmem:[#allocation5 + $0x3d8] sm:$0xf]
    %v783 = vld [vmem:[#allocation5 + $0x3dc] sm:$0xf]
    %v784 = vld [vmem:[#allocation5 + $0x3e0] sm:$0xf]
    %v785 = vld [vmem:[#allocation5 + $0x3e4] sm:$0xf]
    %v786 = vld [vmem:[#allocation5 + $0x3e8] sm:$0xf]
    %v787 = vld [vmem:[#allocation5 + $0x3ec] sm:$0xf]
    %v788 = vld [vmem:[#allocation5 + $0x3f0] sm:$0xf]
    %v789 = vld [vmem:[#allocation5 + $0x3f4] sm:$0xf]
    %v790 = vld [vmem:[#allocation5 + $0x3f8] sm:$0xf]
    %v791 = vld [vmem:[#allocation5 + $0x3fc] sm:$0xf]
    %v792 = vld [vmem:[#allocation5 + $0x400] sm:$0xf]
    %v793 = vld [vmem:[#allocation5 + $0x404] sm:$0xf]
    %v794 = vld [vmem:[#allocation5 + $0x408] sm:$0xf]
    %v795 = vld [vmem:[#allocation5 + $0x40c] sm:$0xf]
    %v796 = vld [vmem:[#allocation5 + $0x410] sm:$0xf]
    %v797 = vld [vmem:[#allocation5 + $0x414] sm:$0xf]
    %v798 = vld [vmem:[#allocation5 + $0x418] sm:$0xf]
    %v799 = vld [vmem:[#allocation5 + $0x41c] sm:$0xf]
    %v800 = vld [vmem:[#allocation5 + $0x420] sm:$0xf]
    %v801 = vld [vmem:[#allocation5 + $0x424] sm:$0xf]
    %v802 = vld [vmem:[#allocation5 + $0x428] sm:$0xf]
    %v803 = vld [vmem:[#allocation5 + $0x42c] sm:$0xf]
    %v804 = vld [vmem:[#allocation5 + $0x430] sm:$0xf]
    %v805 = vld [vmem:[#allocation5 + $0x434] sm:$0xf]
    %v806 = vld [vmem:[#allocation5 + $0x438] sm:$0xf]
    %v807 = vld [vmem:[#allocation5 + $0x43c] sm:$0xf]
    %v808 = vld [vmem:[#allocation5 + $0x440] sm:$0xf]
    %v809 = vld [vmem:[#allocation5 + $0x444] sm:$0xf]
    %v810 = vld [vmem:[#allocation5 + $0x448] sm:$0xf]
    %v811 = vld [vmem:[#allocation5 + $0x44c] sm:$0xf]
    %v812 = vld [vmem:[#allocation5 + $0x450] sm:$0xf]
    %v813 = vld [vmem:[#allocation5 + $0x454] sm:$0xf]
    %v814 = vld [vmem:[#allocation5 + $0x458] sm:$0xf]
    %v815 = vld [vmem:[#allocation5 + $0x45c] sm:$0xf]
    %v816 = vld [vmem:[#allocation5 + $0x460] sm:$0xf]
    %v817 = vld [vmem:[#allocation5 + $0x464] sm:$0xf]
    %v818 = vld [vmem:[#allocation7] sm:$0x1]
    %v820 = vlaneseq
    %v821 = vshrl.u32 %v820, 7
    %v822 = vsub.s32 0, %v821
    %v823 = vrot.slane %v818, %v822
    %v1107 = vunpack.c.l.b16 %v536
    %v1108 = vunpack.c.l.b16 %v537
    %v1109 = vunpack.c.l.b16 %v538
    %v1110 = vunpack.c.l.b16 %v539
    %v1111 = vunpack.c.l.b16 %v540
    %v1112 = vunpack.c.l.b16 %v541
    %v1113 = vunpack.c.l.b16 %v542
    %v1114 = vunpack.c.l.b16 %v543
    %v1115 = vunpack.c.l.b16 %v544
    %v1116 = vunpack.c.l.b16 %v545
    %v1117 = vunpack.c.l.b16 %v546
    %v1118 = vunpack.c.l.b16 %v547
    %v1119 = vunpack.c.l.b16 %v548
    %v1120 = vunpack.c.l.b16 %v549
    %v1121 = vunpack.c.l.b16 %v550
    %v1122 = vunpack.c.l.b16 %v551
    %v1123 = vunpack.c.l.b16 %v552
    %v1124 = vunpack.c.l.b16 %v553
    %v1125 = vunpack.c.l.b16 %v554
    %v1126 = vunpack.c.l.b16 %v555
    %v1127 = vunpack.c.l.b16 %v556
    %v1128 = vunpack.c.l.b16 %v557
    %v1129 = vunpack.c.l.b16 %v558
    %v1130 = vunpack.c.l.b16 %v559
    %v1131 = vunpack.c.l.b16 %v560
    %v1132 = vunpack.c.l.b16 %v561
    %v1133 = vunpack.c.l.b16 %v562
    %v1134 = vunpack.c.l.b16 %v563
    %v1135 = vunpack.c.l.b16 %v564
    %v1136 = vunpack.c.l.b16 %v565
    %v1137 = vunpack.c.l.b16 %v566
    %v1138 = vunpack.c.l.b16 %v567
    %v1139 = vunpack.c.l.b16 %v568
    %v1140 = vunpack.c.l.b16 %v569
    %v1141 = vunpack.c.l.b16 %v570
    %v1142 = vunpack.c.l.b16 %v571
    %v1143 = vunpack.c.l.b16 %v572
    %v1144 = vunpack.c.l.b16 %v573
    %v1145 = vunpack.c.l.b16 %v574
    %v1146 = vunpack.c.l.b16 %v575
    %v1147 = vunpack.c.l.b16 %v576
    %v1148 = vunpack.c.l.b16 %v577
    %v1149 = vunpack.c.l.b16 %v578
    %v1150 = vunpack.c.l.b16 %v579
    %v1151 = vunpack.c.l.b16 %v580
    %v1152 = vunpack.c.l.b16 %v581
    %v1153 = vunpack.c.l.b16 %v582
    %v1154 = vunpack.c.l.b16 %v583
    %v1155 = vunpack.c.l.b16 %v584
    %v1156 = vunpack.c.l.b16 %v585
    %v1157 = vunpack.c.l.b16 %v586
    %v1158 = vunpack.c.l.b16 %v587
    %v1159 = vunpack.c.l.b16 %v588
    %v1160 = vunpack.c.l.b16 %v589
    %v1161 = vunpack.c.l.b16 %v590
    %v1162 = vunpack.c.l.b16 %v591
    %v1163 = vunpack.c.l.b16 %v592
    %v1164 = vunpack.c.l.b16 %v593
    %v1165 = vunpack.c.l.b16 %v594
    %v1166 = vunpack.c.l.b16 %v595
    %v1167 = vunpack.c.l.b16 %v596
    %v1168 = vunpack.c.l.b16 %v597
    %v1169 = vunpack.c.l.b16 %v598
    %v1170 = vunpack.c.l.b16 %v599
    %v1171 = vunpack.c.l.b16 %v600
    %v1172 = vunpack.c.l.b16 %v601
    %v1173 = vunpack.c.l.b16 %v602
    %v1174 = vunpack.c.l.b16 %v603
    %v1175 = vunpack.c.l.b16 %v604
    %v1176 = vunpack.c.l.b16 %v605
    %v1177 = vunpack.c.l.b16 %v606
    %v1178 = vunpack.c.l.b16 %v607
    %v1179 = vunpack.c.l.b16 %v608
    %v1180 = vunpack.c.l.b16 %v609
    %v1181 = vunpack.c.l.b16 %v610
    %v1182 = vunpack.c.l.b16 %v611
    %v1183 = vunpack.c.l.b16 %v612
    %v1184 = vunpack.c.l.b16 %v613
    %v1185 = vunpack.c.l.b16 %v614
    %v1186 = vunpack.c.l.b16 %v615
    %v1187 = vunpack.c.l.b16 %v616
    %v1188 = vunpack.c.l.b16 %v617
    %v1189 = vunpack.c.l.b16 %v618
    %v1190 = vunpack.c.l.b16 %v619
    %v1191 = vunpack.c.l.b16 %v620
    %v1192 = vunpack.c.l.b16 %v621
    %v1193 = vunpack.c.l.b16 %v622
    %v1194 = vunpack.c.l.b16 %v623
    %v1195 = vunpack.c.l.b16 %v624
    %v1196 = vunpack.c.l.b16 %v625
    %v1197 = vunpack.c.l.b16 %v626
    %v1198 = vunpack.c.l.b16 %v627
    %v1199 = vunpack.c.l.b16 %v628
    %v1200 = vunpack.c.l.b16 %v629
    %v1201 = vunpack.c.l.b16 %v630
    %v1202 = vunpack.c.l.b16 %v631
    %v1203 = vunpack.c.l.b16 %v632
    %v1204 = vunpack.c.l.b16 %v633
    %v1205 = vunpack.c.l.b16 %v634
    %v1206 = vunpack.c.l.b16 %v635
    %v1207 = vunpack.c.l.b16 %v636
    %v1208 = vunpack.c.l.b16 %v637
    %v1209 = vunpack.c.l.b16 %v638
    %v1210 = vunpack.c.l.b16 %v639
    %v1211 = vunpack.c.l.b16 %v640
    %v1212 = vunpack.c.l.b16 %v641
    %v1213 = vunpack.c.l.b16 %v642
    %v1214 = vunpack.c.l.b16 %v643
    %v1215 = vunpack.c.l.b16 %v644
    %v1216 = vunpack.c.l.b16 %v645
    %v1217 = vunpack.c.l.b16 %v646
    %v1218 = vunpack.c.l.b16 %v647
    %v1219 = vunpack.c.l.b16 %v648
    %v1220 = vunpack.c.l.b16 %v649
    %v1221 = vunpack.c.l.b16 %v650
    %v1222 = vunpack.c.l.b16 %v651
    %v1223 = vunpack.c.l.b16 %v652
    %v1224 = vunpack.c.l.b16 %v653
    %v1225 = vunpack.c.l.b16 %v654
    %v1226 = vunpack.c.l.b16 %v655
    %v1227 = vunpack.c.l.b16 %v656
    %v1228 = vunpack.c.l.b16 %v657
    %v1229 = vunpack.c.l.b16 %v658
    %v1230 = vunpack.c.l.b16 %v659
    %v1231 = vunpack.c.l.b16 %v660
    %v1232 = vunpack.c.l.b16 %v661
    %v1233 = vunpack.c.l.b16 %v662
    %v1234 = vunpack.c.l.b16 %v663
    %v1235 = vunpack.c.l.b16 %v664
    %v1236 = vunpack.c.l.b16 %v665
    %v1237 = vunpack.c.l.b16 %v666
    %v1238 = vunpack.c.l.b16 %v667
    %v1239 = vunpack.c.l.b16 %v668
    %v1240 = vunpack.c.l.b16 %v669
    %v1241 = vunpack.c.l.b16 %v670
    %v1242 = vunpack.c.l.b16 %v671
    %v1243 = vunpack.c.l.b16 %v672
    %v1244 = vunpack.c.l.b16 %v673
    %v1245 = vunpack.c.l.b16 %v674
    %v1246 = vunpack.c.l.b16 %v675
    %v1247 = vunpack.c.l.b16 %v676
    %v1248 = vunpack.c.l.b16 %v677
    %v1249 = vunpack.c.l.b16 %v678
    %v1250 = vunpack.c.l.b16 %v679
    %v1251 = vunpack.c.l.b16 %v680
    %v1252 = vunpack.c.l.b16 %v681
    %v1253 = vunpack.c.l.b16 %v682
    %v1254 = vunpack.c.l.b16 %v683
    %v1255 = vunpack.c.l.b16 %v684
    %v1256 = vunpack.c.l.b16 %v685
    %v1257 = vunpack.c.l.b16 %v686
    %v1258 = vunpack.c.l.b16 %v687
    %v1259 = vunpack.c.l.b16 %v688
    %v1260 = vunpack.c.l.b16 %v689
    %v1261 = vunpack.c.l.b16 %v690
    %v1262 = vunpack.c.l.b16 %v691
    %v1263 = vunpack.c.l.b16 %v692
    %v1264 = vunpack.c.l.b16 %v693
    %v1265 = vunpack.c.l.b16 %v694
    %v1266 = vunpack.c.l.b16 %v695
    %v1267 = vunpack.c.l.b16 %v696
    %v1268 = vunpack.c.l.b16 %v697
    %v1269 = vunpack.c.l.b16 %v698
    %v1270 = vunpack.c.l.b16 %v699
    %v1271 = vunpack.c.l.b16 %v700
    %v1272 = vunpack.c.l.b16 %v701
    %v1273 = vunpack.c.l.b16 %v702
    %v1274 = vunpack.c.l.b16 %v703
    %v1275 = vunpack.c.l.b16 %v704
    %v1276 = vunpack.c.l.b16 %v705
    %v1277 = vunpack.c.l.b16 %v706
    %v1278 = vunpack.c.l.b16 %v707
    %v1279 = vunpack.c.l.b16 %v708
    %v1280 = vunpack.c.l.b16 %v709
    %v1281 = vunpack.c.l.b16 %v710
    %v1282 = vunpack.c.l.b16 %v711
    %v1283 = vunpack.c.l.b16 %v712
    %v1284 = vunpack.c.l.b16 %v713
    %v1285 = vunpack.c.l.b16 %v714
    %v1286 = vunpack.c.l.b16 %v715
    %v1287 = vunpack.c.l.b16 %v716
    %v1288 = vunpack.c.l.b16 %v717
    %v1289 = vunpack.c.l.b16 %v718
    %v1290 = vunpack.c.l.b16 %v719
    %v1291 = vunpack.c.l.b16 %v720
    %v1292 = vunpack.c.l.b16 %v721
    %v1293 = vunpack.c.l.b16 %v722
    %v1294 = vunpack.c.l.b16 %v723
    %v1295 = vunpack.c.l.b16 %v724
    %v1296 = vunpack.c.l.b16 %v725
    %v1297 = vunpack.c.l.b16 %v726
    %v1298 = vunpack.c.l.b16 %v727
    %v1299 = vunpack.c.l.b16 %v728
    %v1300 = vunpack.c.l.b16 %v729
    %v1301 = vunpack.c.l.b16 %v730
    %v1302 = vunpack.c.l.b16 %v731
    %v1303 = vunpack.c.l.b16 %v732
    %v1304 = vunpack.c.l.b16 %v733
    %v1305 = vunpack.c.l.b16 %v734
    %v1306 = vunpack.c.l.b16 %v735
    %v1307 = vunpack.c.l.b16 %v736
    %v1308 = vunpack.c.l.b16 %v737
    %v1309 = vunpack.c.l.b16 %v738
    %v1310 = vunpack.c.l.b16 %v739
    %v1311 = vunpack.c.l.b16 %v740
    %v1312 = vunpack.c.l.b16 %v741
    %v1313 = vunpack.c.l.b16 %v742
    %v1314 = vunpack.c.l.b16 %v743
    %v1315 = vunpack.c.l.b16 %v744
    %v1316 = vunpack.c.l.b16 %v745
    %v1317 = vunpack.c.l.b16 %v746
    %v1318 = vunpack.c.l.b16 %v747
    %v1319 = vunpack.c.l.b16 %v748
    %v1320 = vunpack.c.l.b16 %v749
    %v1321 = vunpack.c.l.b16 %v750
    %v1322 = vunpack.c.l.b16 %v751
    %v1323 = vunpack.c.l.b16 %v752
    %v1324 = vunpack.c.l.b16 %v753
    %v1325 = vunpack.c.l.b16 %v754
    %v1326 = vunpack.c.l.b16 %v755
    %v1327 = vunpack.c.l.b16 %v756
    %v1328 = vunpack.c.l.b16 %v757
    %v1329 = vunpack.c.l.b16 %v758
    %v1330 = vunpack.c.l.b16 %v759
    %v1331 = vunpack.c.l.b16 %v760
    %v1332 = vunpack.c.l.b16 %v761
    %v1333 = vunpack.c.l.b16 %v762
    %v1334 = vunpack.c.l.b16 %v763
    %v1335 = vunpack.c.l.b16 %v764
    %v1336 = vunpack.c.l.b16 %v765
    %v1337 = vunpack.c.l.b16 %v766
    %v1338 = vunpack.c.l.b16 %v767
    %v1339 = vunpack.c.l.b16 %v768
    %v1340 = vunpack.c.l.b16 %v769
    %v1341 = vunpack.c.l.b16 %v770
    %v1342 = vunpack.c.l.b16 %v771
    %v1343 = vunpack.c.l.b16 %v772
    %v1344 = vunpack.c.l.b16 %v773
    %v1345 = vunpack.c.l.b16 %v774
    %v1346 = vunpack.c.l.b16 %v775
    %v1347 = vunpack.c.l.b16 %v776
    %v1348 = vunpack.c.l.b16 %v777
    %v1349 = vunpack.c.l.b16 %v778
    %v1350 = vunpack.c.l.b16 %v779
    %v1351 = vunpack.c.l.b16 %v780
    %v1352 = vunpack.c.l.b16 %v781
    %v1353 = vunpack.c.l.b16 %v782
    %v1354 = vunpack.c.l.b16 %v783
    %v1355 = vunpack.c.l.b16 %v784
    %v1356 = vunpack.c.l.b16 %v785
    %v1357 = vunpack.c.l.b16 %v786
    %v1358 = vunpack.c.l.b16 %v787
    %v1359 = vunpack.c.l.b16 %v788
    %v1360 = vunpack.c.l.b16 %v789
    %v1361 = vunpack.c.l.b16 %v790
    %v1362 = vunpack.c.l.b16 %v791
    %v1363 = vunpack.c.l.b16 %v792
    %v1364 = vunpack.c.l.b16 %v793
    %v1365 = vunpack.c.l.b16 %v794
    %v1366 = vunpack.c.l.b16 %v795
    %v1367 = vunpack.c.l.b16 %v796
    %v1368 = vunpack.c.l.b16 %v797
    %v1369 = vunpack.c.l.b16 %v798
    %v1370 = vunpack.c.l.b16 %v799
    %v1371 = vunpack.c.l.b16 %v800
    %v1372 = vunpack.c.l.b16 %v801
    %v1373 = vunpack.c.l.b16 %v802
    %v1374 = vunpack.c.l.b16 %v803
    %v1375 = vunpack.c.l.b16 %v804
    %v1376 = vunpack.c.l.b16 %v805
    %v1377 = vunpack.c.l.b16 %v806
    %v1378 = vunpack.c.l.b16 %v807
    %v1379 = vunpack.c.l.b16 %v808
    %v1380 = vunpack.c.l.b16 %v809
    %v1381 = vunpack.c.l.b16 %v810
    %v1382 = vunpack.c.l.b16 %v811
    %v1383 = vunpack.c.l.b16 %v812
    %v1384 = vunpack.c.l.b16 %v813
    %v1385 = vunpack.c.l.b16 %v814
    %v1386 = vunpack.c.l.b16 %v815
    %v1387 = vunpack.c.l.b16 %v816
    %v1388 = vunpack.c.l.b16 %v817
    %v1389 = vpack.c.b16 %v1108, %v1107
    %v1390 = vpack.c.b16 %v1110, %v1109
    %v1391 = vpack.c.b16 %v1112, %v1111
    %v1392 = vpack.c.b16 %v1114, %v1113
    %v1393 = vpack.c.b16 %v1116, %v1115
    %v1394 = vpack.c.b16 %v1118, %v1117
    %v1395 = vpack.c.b16 %v1120, %v1119
    %v1396 = vpack.c.b16 %v1122, %v1121
    %v1397 = vpack.c.b16 %v1124, %v1123
    %v1398 = vpack.c.b16 %v1126, %v1125
    %v1399 = vpack.c.b16 %v1128, %v1127
    %v1400 = vpack.c.b16 %v1130, %v1129
    %v1401 = vpack.c.b16 %v1132, %v1131
    %v1402 = vpack.c.b16 %v1134, %v1133
    %v1403 = vpack.c.b16 %v1136, %v1135
    %v1404 = vpack.c.b16 %v1138, %v1137
    %v1405 = vpack.c.b16 %v1140, %v1139
    %v1406 = vpack.c.b16 %v1142, %v1141
    %v1407 = vpack.c.b16 %v1144, %v1143
    %v1408 = vpack.c.b16 %v1146, %v1145
    %v1409 = vpack.c.b16 %v1148, %v1147
    %v1410 = vpack.c.b16 %v1150, %v1149
    %v1411 = vpack.c.b16 %v1152, %v1151
    %v1412 = vpack.c.b16 %v1154, %v1153
    %v1413 = vpack.c.b16 %v1156, %v1155
    %v1414 = vpack.c.b16 %v1158, %v1157
    %v1415 = vpack.c.b16 %v1160, %v1159
    %v1416 = vpack.c.b16 %v1162, %v1161
    %v1417 = vpack.c.b16 %v1164, %v1163
    %v1418 = vpack.c.b16 %v1166, %v1165
    %v1419 = vpack.c.b16 %v1168, %v1167
    %v1420 = vpack.c.b16 %v1170, %v1169
    %v1421 = vpack.c.b16 %v1172, %v1171
    %v1422 = vpack.c.b16 %v1174, %v1173
    %v1423 = vpack.c.b16 %v1176, %v1175
    %v1424 = vpack.c.b16 %v1178, %v1177
    %v1425 = vpack.c.b16 %v1180, %v1179
    %v1426 = vpack.c.b16 %v1182, %v1181
    %v1427 = vpack.c.b16 %v1184, %v1183
    %v1428 = vpack.c.b16 %v1186, %v1185
    %v1429 = vpack.c.b16 %v1188, %v1187
    %v1430 = vpack.c.b16 %v1190, %v1189
    %v1431 = vpack.c.b16 %v1192, %v1191
    %v1432 = vpack.c.b16 %v1194, %v1193
    %v1433 = vpack.c.b16 %v1196, %v1195
    %v1434 = vpack.c.b16 %v1198, %v1197
    %v1435 = vpack.c.b16 %v1200, %v1199
    %v1436 = vpack.c.b16 %v1202, %v1201
    %v1437 = vpack.c.b16 %v1204, %v1203
    %v1438 = vpack.c.b16 %v1206, %v1205
    %v1439 = vpack.c.b16 %v1208, %v1207
    %v1440 = vpack.c.b16 %v1210, %v1209
    %v1441 = vpack.c.b16 %v1212, %v1211
    %v1442 = vpack.c.b16 %v1214, %v1213
    %v1443 = vpack.c.b16 %v1216, %v1215
    %v1444 = vpack.c.b16 %v1218, %v1217
    %v1445 = vpack.c.b16 %v1220, %v1219
    %v1446 = vpack.c.b16 %v1222, %v1221
    %v1447 = vpack.c.b16 %v1224, %v1223
    %v1448 = vpack.c.b16 %v1226, %v1225
    %v1449 = vpack.c.b16 %v1228, %v1227
    %v1450 = vpack.c.b16 %v1230, %v1229
    %v1451 = vpack.c.b16 %v1232, %v1231
    %v1452 = vpack.c.b16 %v1234, %v1233
    %v1453 = vpack.c.b16 %v1236, %v1235
    %v1454 = vpack.c.b16 %v1238, %v1237
    %v1455 = vpack.c.b16 %v1240, %v1239
    %v1456 = vpack.c.b16 %v1242, %v1241
    %v1457 = vpack.c.b16 %v1244, %v1243
    %v1458 = vpack.c.b16 %v1246, %v1245
    %v1459 = vpack.c.b16 %v1248, %v1247
    %v1460 = vpack.c.b16 %v1250, %v1249
    %v1461 = vpack.c.b16 %v1252, %v1251
    %v1462 = vpack.c.b16 %v1254, %v1253
    %v1463 = vpack.c.b16 %v1256, %v1255
    %v1464 = vpack.c.b16 %v1258, %v1257
    %v1465 = vpack.c.b16 %v1260, %v1259
    %v1466 = vpack.c.b16 %v1262, %v1261
    %v1467 = vpack.c.b16 %v1264, %v1263
    %v1468 = vpack.c.b16 %v1266, %v1265
    %v1469 = vpack.c.b16 %v1268, %v1267
    %v1470 = vpack.c.b16 %v1270, %v1269
    %v1471 = vpack.c.b16 %v1272, %v1271
    %v1472 = vpack.c.b16 %v1274, %v1273
    %v1473 = vpack.c.b16 %v1276, %v1275
    %v1474 = vpack.c.b16 %v1278, %v1277
    %v1475 = vpack.c.b16 %v1280, %v1279
    %v1476 = vpack.c.b16 %v1282, %v1281
    %v1477 = vpack.c.b16 %v1284, %v1283
    %v1478 = vpack.c.b16 %v1286, %v1285
    %v1479 = vpack.c.b16 %v1288, %v1287
    %v1480 = vpack.c.b16 %v1290, %v1289
    %v1481 = vpack.c.b16 %v1292, %v1291
    %v1482 = vpack.c.b16 %v1294, %v1293
    %v1483 = vpack.c.b16 %v1296, %v1295
    %v1484 = vpack.c.b16 %v1298, %v1297
    %v1485 = vpack.c.b16 %v1300, %v1299
    %v1486 = vpack.c.b16 %v1302, %v1301
    %v1487 = vpack.c.b16 %v1304, %v1303
    %v1488 = vpack.c.b16 %v1306, %v1305
    %v1489 = vpack.c.b16 %v1308, %v1307
    %v1490 = vpack.c.b16 %v1310, %v1309
    %v1491 = vpack.c.b16 %v1312, %v1311
    %v1492 = vpack.c.b16 %v1314, %v1313
    %v1493 = vpack.c.b16 %v1316, %v1315
    %v1494 = vpack.c.b16 %v1318, %v1317
    %v1495 = vpack.c.b16 %v1320, %v1319
    %v1496 = vpack.c.b16 %v1322, %v1321
    %v1497 = vpack.c.b16 %v1324, %v1323
    %v1498 = vpack.c.b16 %v1326, %v1325
    %v1499 = vpack.c.b16 %v1328, %v1327
    %v1500 = vpack.c.b16 %v1330, %v1329
    %v1501 = vpack.c.b16 %v1332, %v1331
    %v1502 = vpack.c.b16 %v1334, %v1333
    %v1503 = vpack.c.b16 %v1336, %v1335
    %v1504 = vpack.c.b16 %v1338, %v1337
    %v1505 = vpack.c.b16 %v1340, %v1339
    %v1506 = vpack.c.b16 %v1342, %v1341
    %v1507 = vpack.c.b16 %v1344, %v1343
    %v1508 = vpack.c.b16 %v1346, %v1345
    %v1509 = vpack.c.b16 %v1348, %v1347
    %v1510 = vpack.c.b16 %v1350, %v1349
    %v1511 = vpack.c.b16 %v1352, %v1351
    %v1512 = vpack.c.b16 %v1354, %v1353
    %v1513 = vpack.c.b16 %v1356, %v1355
    %v1514 = vpack.c.b16 %v1358, %v1357
    %v1515 = vpack.c.b16 %v1360, %v1359
    %v1516 = vpack.c.b16 %v1362, %v1361
    %v1517 = vpack.c.b16 %v1364, %v1363
    %v1518 = vpack.c.b16 %v1366, %v1365
    %v1519 = vpack.c.b16 %v1368, %v1367
    %v1520 = vpack.c.b16 %v1370, %v1369
    %v1521 = vpack.c.b16 %v1372, %v1371
    %v1522 = vpack.c.b16 %v1374, %v1373
    %v1523 = vpack.c.b16 %v1376, %v1375
    %v1524 = vpack.c.b16 %v1378, %v1377
    %v1525 = vpack.c.b16 %v1380, %v1379
    %v1526 = vpack.c.b16 %v1382, %v1381
    %v1527 = vpack.c.b16 %v1384, %v1383
    %v1528 = vpack.c.b16 %v1386, %v1385
    %v1529 = vpack.c.b16 %v1388, %v1387
    %vm1670 = vcmask 646144
    %v1672 = vsel %vm1670, %v535, 0
    %vm1674 = vcmask 1046528
    %vm1675 = vcmask 1047552
    %v1676 = vsel %vm1674, 4294967295, 65535
    %v1677 = vsel %vm1675, %v1676, 0
    %v1679 = vand.u32 %v1529, %v1677
    %1681 = vmatprep.subr.bf16.mxu0 0
    %1682 = vmatpush1.bf16.msra.mxu0 %v1396
    %1683 = vmatprep.subr.bf16.mxu0 0
    %1684 = vmatpush1.bf16.msra.mxu0 %v1395
    %1685 = vmatprep.subr.bf16.mxu0 0
    %1686 = vmatpush1.bf16.msra.mxu0 %v1394
    %1687 = vmatprep.subr.bf16.mxu0 0
    %1688 = vmatpush1.bf16.msra.mxu0 %v1393
    %1689 = vmatprep.subr.bf16.mxu0 0
    %1690 = vmatpush1.bf16.msra.mxu0 %v1392
    %1691 = vmatprep.subr.bf16.mxu0 0
    %1692 = vmatpush1.bf16.msra.mxu0 %v1391
    %1693 = vmatprep.subr.bf16.mxu0 0
    %1694 = vmatpush1.bf16.msra.mxu0 %v1390
    %1695 = vmatprep.subr.bf16.mxu0 0
    %1696 = vmatpush1.bf16.msra.mxu0 %v1389
    %1697 = vmatprep.subr.bf16.mxu0 0
    %1698 = vmatpush2.bf16.msra.mxu0 %v1404
    %1699 = vmatprep.subr.bf16.mxu0 0
    %1700 = vmatpush2.bf16.msra.mxu0 %v1403
    %1701 = vmatprep.subr.bf16.mxu0 0
    %1702 = vmatpush2.bf16.msra.mxu0 %v1402
    %1703 = vmatprep.subr.bf16.mxu0 0
    %1704 = vmatpush2.bf16.msra.mxu0 %v1401
    %1705 = vmatprep.subr.bf16.mxu0 0
    %1706 = vmatpush2.bf16.msra.mxu0 %v1400
    %1707 = vmatprep.subr.bf16.mxu0 0
    %1708 = vmatpush2.bf16.msra.mxu0 %v1399
    %1709 = vmatprep.subr.bf16.mxu0 0
    %1710 = vmatpush2.bf16.msra.mxu0 %v1398
    %1711 = vmatprep.subr.bf16.mxu0 0
    %1712 = vmatpush2.bf16.msra.mxu0 %v1397
    %1713 = vmatprep.mubr.bf16.mxu0 %v519
    %1714 = vmatmul.mubr.bf16.gmra.mxu0 %v518
    %v1715 = vpop.f32.mrf.mxu0
    %v1716 = vadd.f32 %v823, %v1715
    %v1717 = vpop.f32.mrf.mxu0
    %v1718 = vpop.f32.mrf.mxu0
    %v1719 = vadd.f32 %v823, %v1718
    %v1720 = vpop.f32.mrf.mxu0
    %1721 = vdwg.mxu0
    %1722 = vmatprep.subr.bf16.mxu0 0
    %1723 = vmatpush1.bf16.msra.mxu0 %v1412
    %1724 = vmatprep.subr.bf16.mxu0 0
    %1725 = vmatpush1.bf16.msra.mxu0 %v1411
    %1726 = vmatprep.subr.bf16.mxu0 0
    %1727 = vmatpush1.bf16.msra.mxu0 %v1410
    %1728 = vmatprep.subr.bf16.mxu0 0
    %1729 = vmatpush1.bf16.msra.mxu0 %v1409
    %1730 = vmatprep.subr.bf16.mxu0 0
    %1731 = vmatpush1.bf16.msra.mxu0 %v1408
    %1732 = vmatprep.subr.bf16.mxu0 0
    %1733 = vmatpush1.bf16.msra.mxu0 %v1407
    %1734 = vmatprep.subr.bf16.mxu0 0
    %1735 = vmatpush1.bf16.msra.mxu0 %v1406
    %1736 = vmatprep.subr.bf16.mxu0 0
    %1737 = vmatpush1.bf16.msra.mxu0 %v1405
    %1738 = vmatprep.subr.bf16.mxu0 0
    %1739 = vmatpush2.bf16.msra.mxu0 %v1420
    %1740 = vmatprep.subr.bf16.mxu0 0
    %1741 = vmatpush2.bf16.msra.mxu0 %v1419
    %1742 = vmatprep.subr.bf16.mxu0 0
    %1743 = vmatpush2.bf16.msra.mxu0 %v1418
    %1744 = vmatprep.subr.bf16.mxu0 0
    %1745 = vmatpush2.bf16.msra.mxu0 %v1417
    %1746 = vmatprep.subr.bf16.mxu0 0
    %1747 = vmatpush2.bf16.msra.mxu0 %v1416
    %1748 = vmatprep.subr.bf16.mxu0 0
    %1749 = vmatpush2.bf16.msra.mxu0 %v1415
    %1750 = vmatprep.subr.bf16.mxu0 0
    %1751 = vmatpush2.bf16.msra.mxu0 %v1414
    %1752 = vmatprep.subr.bf16.mxu0 0
    %1753 = vmatpush2.bf16.msra.mxu0 %v1413
    %1754 = vmatprep.mubr.bf16.mxu0 %v521
    %1755 = vmatmul.mubr.bf16.gmra.mxu0 %v520
    %v1756 = vpop.f32.mrf.mxu0
    %v1757 = vadd.f32 %v1716, %v1756
    %v1758 = vpop.f32.mrf.mxu0
    %v1759 = vpop.f32.mrf.mxu0
    %v1760 = vadd.f32 %v1719, %v1759
    %v1761 = vpop.f32.mrf.mxu0
    %1762 = vdwg.mxu0
    %1763 = vmatprep.subr.bf16.mxu0 0
    %1764 = vmatpush1.bf16.msra.mxu0 %v1428
    %1765 = vmatprep.subr.bf16.mxu0 0
    %1766 = vmatpush1.bf16.msra.mxu0 %v1427
    %1767 = vmatprep.subr.bf16.mxu0 0
    %1768 = vmatpush1.bf16.msra.mxu0 %v1426
    %1769 = vmatprep.subr.bf16.mxu0 0
    %1770 = vmatpush1.bf16.msra.mxu0 %v1425
    %1771 = vmatprep.subr.bf16.mxu0 0
    %1772 = vmatpush1.bf16.msra.mxu0 %v1424
    %1773 = vmatprep.subr.bf16.mxu0 0
    %1774 = vmatpush1.bf16.msra.mxu0 %v1423
    %1775 = vmatprep.subr.bf16.mxu0 0
    %1776 = vmatpush1.bf16.msra.mxu0 %v1422
    %1777 = vmatprep.subr.bf16.mxu0 0
    %1778 = vmatpush1.bf16.msra.mxu0 %v1421
    %1779 = vmatprep.subr.bf16.mxu0 0
    %1780 = vmatpush2.bf16.msra.mxu0 %v1436
    %1781 = vmatprep.subr.bf16.mxu0 0
    %1782 = vmatpush2.bf16.msra.mxu0 %v1435
    %1783 = vmatprep.subr.bf16.mxu0 0
    %1784 = vmatpush2.bf16.msra.mxu0 %v1434
    %1785 = vmatprep.subr.bf16.mxu0 0
    %1786 = vmatpush2.bf16.msra.mxu0 %v1433
    %1787 = vmatprep.subr.bf16.mxu0 0
    %1788 = vmatpush2.bf16.msra.mxu0 %v1432
    %1789 = vmatprep.subr.bf16.mxu0 0
    %1790 = vmatpush2.bf16.msra.mxu0 %v1431
    %1791 = vmatprep.subr.bf16.mxu0 0
    %1792 = vmatpush2.bf16.msra.mxu0 %v1430
    %1793 = vmatprep.subr.bf16.mxu0 0
    %1794 = vmatpush2.bf16.msra.mxu0 %v1429
    %1795 = vmatprep.mubr.bf16.mxu0 %v523
    %1796 = vmatmul.mubr.bf16.gmra.mxu0 %v522
    %v1797 = vpop.f32.mrf.mxu0
    %v1798 = vadd.f32 %v1757, %v1797
    %v1799 = vpop.f32.mrf.mxu0
    %v1800 = vpop.f32.mrf.mxu0
    %v1801 = vadd.f32 %v1760, %v1800
    %v1802 = vpop.f32.mrf.mxu0
    %1803 = vdwg.mxu0
    %1804 = vmatprep.subr.bf16.mxu0 0
    %1805 = vmatpush1.bf16.msra.mxu0 %v1444
    %1806 = vmatprep.subr.bf16.mxu0 0
    %1807 = vmatpush1.bf16.msra.mxu0 %v1443
    %1808 = vmatprep.subr.bf16.mxu0 0
    %1809 = vmatpush1.bf16.msra.mxu0 %v1442
    %1810 = vmatprep.subr.bf16.mxu0 0
    %1811 = vmatpush1.bf16.msra.mxu0 %v1441
    %1812 = vmatprep.subr.bf16.mxu0 0
    %1813 = vmatpush1.bf16.msra.mxu0 %v1440
    %1814 = vmatprep.subr.bf16.mxu0 0
    %1815 = vmatpush1.bf16.msra.mxu0 %v1439
    %1816 = vmatprep.subr.bf16.mxu0 0
    %1817 = vmatpush1.bf16.msra.mxu0 %v1438
    %1818 = vmatprep.subr.bf16.mxu0 0
    %1819 = vmatpush1.bf16.msra.mxu0 %v1437
    %1820 = vmatprep.subr.bf16.mxu0 0
    %1821 = vmatpush2.bf16.msra.mxu0 %v1452
    %1822 = vmatprep.subr.bf16.mxu0 0
    %1823 = vmatpush2.bf16.msra.mxu0 %v1451
    %1824 = vmatprep.subr.bf16.mxu0 0
    %1825 = vmatpush2.bf16.msra.mxu0 %v1450
    %1826 = vmatprep.subr.bf16.mxu0 0
    %1827 = vmatpush2.bf16.msra.mxu0 %v1449
    %1828 = vmatprep.subr.bf16.mxu0 0
    %1829 = vmatpush2.bf16.msra.mxu0 %v1448
    %1830 = vmatprep.subr.bf16.mxu0 0
    %1831 = vmatpush2.bf16.msra.mxu0 %v1447
    %1832 = vmatprep.subr.bf16.mxu0 0
    %1833 = vmatpush2.bf16.msra.mxu0 %v1446
    %1834 = vmatprep.subr.bf16.mxu0 0
    %1835 = vmatpush2.bf16.msra.mxu0 %v1445
    %1836 = vmatprep.mubr.bf16.mxu0 %v525
    %1837 = vmatmul.mubr.bf16.gmra.mxu0 %v524
    %v1838 = vpop.f32.mrf.mxu0
    %v1839 = vadd.f32 %v1798, %v1838
    %v1840 = vpop.f32.mrf.mxu0
    %v1841 = vpop.f32.mrf.mxu0
    %v1842 = vadd.f32 %v1801, %v1841
    %v1843 = vpop.f32.mrf.mxu0
    %1844 = vdwg.mxu0
    %1845 = vmatprep.subr.bf16.mxu0 0
    %1846 = vmatpush1.bf16.msra.mxu0 %v1460
    %1847 = vmatprep.subr.bf16.mxu0 0
    %1848 = vmatpush1.bf16.msra.mxu0 %v1459
    %1849 = vmatprep.subr.bf16.mxu0 0
    %1850 = vmatpush1.bf16.msra.mxu0 %v1458
    %1851 = vmatprep.subr.bf16.mxu0 0
    %1852 = vmatpush1.bf16.msra.mxu0 %v1457
    %1853 = vmatprep.subr.bf16.mxu0 0
    %1854 = vmatpush1.bf16.msra.mxu0 %v1456
    %1855 = vmatprep.subr.bf16.mxu0 0
    %1856 = vmatpush1.bf16.msra.mxu0 %v1455
    %1857 = vmatprep.subr.bf16.mxu0 0
    %1858 = vmatpush1.bf16.msra.mxu0 %v1454
    %1859 = vmatprep.subr.bf16.mxu0 0
    %1860 = vmatpush1.bf16.msra.mxu0 %v1453
    %1861 = vmatprep.subr.bf16.mxu0 0
    %1862 = vmatpush2.bf16.msra.mxu0 %v1468
    %1863 = vmatprep.subr.bf16.mxu0 0
    %1864 = vmatpush2.bf16.msra.mxu0 %v1467
    %1865 = vmatprep.subr.bf16.mxu0 0
    %1866 = vmatpush2.bf16.msra.mxu0 %v1466
    %1867 = vmatprep.subr.bf16.mxu0 0
    %1868 = vmatpush2.bf16.msra.mxu0 %v1465
    %1869 = vmatprep.subr.bf16.mxu0 0
    %1870 = vmatpush2.bf16.msra.mxu0 %v1464
    %1871 = vmatprep.subr.bf16.mxu0 0
    %1872 = vmatpush2.bf16.msra.mxu0 %v1463
    %1873 = vmatprep.subr.bf16.mxu0 0
    %1874 = vmatpush2.bf16.msra.mxu0 %v1462
    %1875 = vmatprep.subr.bf16.mxu0 0
    %1876 = vmatpush2.bf16.msra.mxu0 %v1461
    %1877 = vmatprep.mubr.bf16.mxu0 %v527
    %1878 = vmatmul.mubr.bf16.gmra.mxu0 %v526
    %v1879 = vpop.f32.mrf.mxu0
    %v1880 = vadd.f32 %v1839, %v1879
    %v1881 = vpop.f32.mrf.mxu0
    %v1882 = vpop.f32.mrf.mxu0
    %v1883 = vadd.f32 %v1842, %v1882
    %v1884 = vpop.f32.mrf.mxu0
    %1885 = vdwg.mxu0
    %1886 = vmatprep.subr.bf16.mxu0 0
    %1887 = vmatpush1.bf16.msra.mxu0 %v1476
    %1888 = vmatprep.subr.bf16.mxu0 0
    %1889 = vmatpush1.bf16.msra.mxu0 %v1475
    %1890 = vmatprep.subr.bf16.mxu0 0
    %1891 = vmatpush1.bf16.msra.mxu0 %v1474
    %1892 = vmatprep.subr.bf16.mxu0 0
    %1893 = vmatpush1.bf16.msra.mxu0 %v1473
    %1894 = vmatprep.subr.bf16.mxu0 0
    %1895 = vmatpush1.bf16.msra.mxu0 %v1472
    %1896 = vmatprep.subr.bf16.mxu0 0
    %1897 = vmatpush1.bf16.msra.mxu0 %v1471
    %1898 = vmatprep.subr.bf16.mxu0 0
    %1899 = vmatpush1.bf16.msra.mxu0 %v1470
    %1900 = vmatprep.subr.bf16.mxu0 0
    %1901 = vmatpush1.bf16.msra.mxu0 %v1469
    %1902 = vmatprep.subr.bf16.mxu0 0
    %1903 = vmatpush2.bf16.msra.mxu0 %v1484
    %1904 = vmatprep.subr.bf16.mxu0 0
    %1905 = vmatpush2.bf16.msra.mxu0 %v1483
    %1906 = vmatprep.subr.bf16.mxu0 0
    %1907 = vmatpush2.bf16.msra.mxu0 %v1482
    %1908 = vmatprep.subr.bf16.mxu0 0
    %1909 = vmatpush2.bf16.msra.mxu0 %v1481
    %1910 = vmatprep.subr.bf16.mxu0 0
    %1911 = vmatpush2.bf16.msra.mxu0 %v1480
    %1912 = vmatprep.subr.bf16.mxu0 0
    %1913 = vmatpush2.bf16.msra.mxu0 %v1479
    %1914 = vmatprep.subr.bf16.mxu0 0
    %1915 = vmatpush2.bf16.msra.mxu0 %v1478
    %1916 = vmatprep.subr.bf16.mxu0 0
    %1917 = vmatpush2.bf16.msra.mxu0 %v1477
    %1918 = vmatprep.mubr.bf16.mxu0 %v529
    %1919 = vmatmul.mubr.bf16.gmra.mxu0 %v528
    %v1920 = vpop.f32.mrf.mxu0
    %v1921 = vadd.f32 %v1880, %v1920
    %v1922 = vpop.f32.mrf.mxu0
    %v1923 = vpop.f32.mrf.mxu0
    %v1924 = vadd.f32 %v1883, %v1923
    %v1925 = vpop.f32.mrf.mxu0
    %1926 = vdwg.mxu0
    %1927 = vmatprep.subr.bf16.mxu0 0
    %1928 = vmatpush1.bf16.msra.mxu0 %v1492
    %1929 = vmatprep.subr.bf16.mxu0 0
    %1930 = vmatpush1.bf16.msra.mxu0 %v1491
    %1931 = vmatprep.subr.bf16.mxu0 0
    %1932 = vmatpush1.bf16.msra.mxu0 %v1490
    %1933 = vmatprep.subr.bf16.mxu0 0
    %1934 = vmatpush1.bf16.msra.mxu0 %v1489
    %1935 = vmatprep.subr.bf16.mxu0 0
    %1936 = vmatpush1.bf16.msra.mxu0 %v1488
    %1937 = vmatprep.subr.bf16.mxu0 0
    %1938 = vmatpush1.bf16.msra.mxu0 %v1487
    %1939 = vmatprep.subr.bf16.mxu0 0
    %1940 = vmatpush1.bf16.msra.mxu0 %v1486
    %1941 = vmatprep.subr.bf16.mxu0 0
    %1942 = vmatpush1.bf16.msra.mxu0 %v1485
    %1943 = vmatprep.subr.bf16.mxu0 0
    %1944 = vmatpush2.bf16.msra.mxu0 %v1500
    %1945 = vmatprep.subr.bf16.mxu0 0
    %1946 = vmatpush2.bf16.msra.mxu0 %v1499
    %1947 = vmatprep.subr.bf16.mxu0 0
    %1948 = vmatpush2.bf16.msra.mxu0 %v1498
    %1949 = vmatprep.subr.bf16.mxu0 0
    %1950 = vmatpush2.bf16.msra.mxu0 %v1497
    %1951 = vmatprep.subr.bf16.mxu0 0
    %1952 = vmatpush2.bf16.msra.mxu0 %v1496
    %1953 = vmatprep.subr.bf16.mxu0 0
    %1954 = vmatpush2.bf16.msra.mxu0 %v1495
    %1955 = vmatprep.subr.bf16.mxu0 0
    %1956 = vmatpush2.bf16.msra.mxu0 %v1494
    %1957 = vmatprep.subr.bf16.mxu0 0
    %1958 = vmatpush2.bf16.msra.mxu0 %v1493
    %1959 = vmatprep.mubr.bf16.mxu0 %v531
    %1960 = vmatmul.mubr.bf16.gmra.mxu0 %v530
    %v1961 = vpop.f32.mrf.mxu0
    %v1962 = vadd.f32 %v1921, %v1961
    %v1963 = vpop.f32.mrf.mxu0
    %v1964 = vpop.f32.mrf.mxu0
    %v1965 = vadd.f32 %v1924, %v1964
    %v1966 = vpop.f32.mrf.mxu0
    %1967 = vdwg.mxu0
    %1968 = vmatprep.subr.bf16.mxu0 0
    %1969 = vmatpush1.bf16.msra.mxu0 %v1508
    %1970 = vmatprep.subr.bf16.mxu0 0
    %1971 = vmatpush1.bf16.msra.mxu0 %v1507
    %1972 = vmatprep.subr.bf16.mxu0 0
    %1973 = vmatpush1.bf16.msra.mxu0 %v1506
    %1974 = vmatprep.subr.bf16.mxu0 0
    %1975 = vmatpush1.bf16.msra.mxu0 %v1505
    %1976 = vmatprep.subr.bf16.mxu0 0
    %1977 = vmatpush1.bf16.msra.mxu0 %v1504
    %1978 = vmatprep.subr.bf16.mxu0 0
    %1979 = vmatpush1.bf16.msra.mxu0 %v1503
    %1980 = vmatprep.subr.bf16.mxu0 0
    %1981 = vmatpush1.bf16.msra.mxu0 %v1502
    %1982 = vmatprep.subr.bf16.mxu0 0
    %1983 = vmatpush1.bf16.msra.mxu0 %v1501
    %1984 = vmatprep.subr.bf16.mxu0 0
    %1985 = vmatpush2.bf16.msra.mxu0 %v1516
    %1986 = vmatprep.subr.bf16.mxu0 0
    %1987 = vmatpush2.bf16.msra.mxu0 %v1515
    %1988 = vmatprep.subr.bf16.mxu0 0
    %1989 = vmatpush2.bf16.msra.mxu0 %v1514
    %1990 = vmatprep.subr.bf16.mxu0 0
    %1991 = vmatpush2.bf16.msra.mxu0 %v1513
    %1992 = vmatprep.subr.bf16.mxu0 0
    %1993 = vmatpush2.bf16.msra.mxu0 %v1512
    %1994 = vmatprep.subr.bf16.mxu0 0
    %1995 = vmatpush2.bf16.msra.mxu0 %v1511
    %1996 = vmatprep.subr.bf16.mxu0 0
    %1997 = vmatpush2.bf16.msra.mxu0 %v1510
    %1998 = vmatprep.subr.bf16.mxu0 0
    %1999 = vmatpush2.bf16.msra.mxu0 %v1509
    %2000 = vmatprep.mubr.bf16.mxu0 %v533
    %2001 = vmatmul.mubr.bf16.gmra.mxu0 %v532
    %v2002 = vpop.f32.mrf.mxu0
    %v2003 = vadd.f32 %v1962, %v2002
    %v2004 = vpop.f32.mrf.mxu0
    %v2005 = vpop.f32.mrf.mxu0
    %v2006 = vadd.f32 %v1965, %v2005
    %v2007 = vpop.f32.mrf.mxu0
    %2008 = vdwg.mxu0
    %2009 = vmatprep.subr.bf16.mxu0 0
    %2010 = vmatpush1.bf16.msra.mxu0 %v1524
    %2011 = vmatprep.subr.bf16.mxu0 0
    %2012 = vmatpush1.bf16.msra.mxu0 %v1523
    %2013 = vmatprep.subr.bf16.mxu0 0
    %2014 = vmatpush1.bf16.msra.mxu0 %v1522
    %2015 = vmatprep.subr.bf16.mxu0 0
    %2016 = vmatpush1.bf16.msra.mxu0 %v1521
    %2017 = vmatprep.subr.bf16.mxu0 0
    %2018 = vmatpush1.bf16.msra.mxu0 %v1520
    %2019 = vmatprep.subr.bf16.mxu0 0
    %2020 = vmatpush1.bf16.msra.mxu0 %v1519
    %2021 = vmatprep.subr.bf16.mxu0 0
    %2022 = vmatpush1.bf16.msra.mxu0 %v1518
    %2023 = vmatprep.subr.bf16.mxu0 0
    %2024 = vmatpush1.bf16.msra.mxu0 %v1517
    %2025 = vmatprep.subr.bf16.mxu0 0
    %2026 = vmatpush2.bf16.msra.mxu0 0
    %2027 = vmatprep.subr.bf16.mxu0 0
    %2028 = vmatpush2.bf16.msra.mxu0 0
    %2029 = vmatprep.subr.bf16.mxu0 0
    %2030 = vmatpush2.bf16.msra.mxu0 0
    %2031 = vmatprep.subr.bf16.mxu0 0
    %2032 = vmatpush2.bf16.msra.mxu0 %v1679
    %2033 = vmatprep.subr.bf16.mxu0 0
    %2034 = vmatpush2.bf16.msra.mxu0 %v1528
    %2035 = vmatprep.subr.bf16.mxu0 0
    %2036 = vmatpush2.bf16.msra.mxu0 %v1527
    %2037 = vmatprep.subr.bf16.mxu0 0
    %2038 = vmatpush2.bf16.msra.mxu0 %v1526
    %2039 = vmatprep.subr.bf16.mxu0 0
    %2040 = vmatpush2.bf16.msra.mxu0 %v1525
    %2041 = vmatprep.mubr.bf16.mxu0 %v1672
    %2042 = vmatmul.mubr.bf16.gmra.mxu0 %v534
    %v2043 = vpop.f32.mrf.mxu0
    %v2044 = vadd.f32 %v2003, %v2043
    %v2045 = vpop.f32.mrf.mxu0
    %v2046 = vpop.f32.mrf.mxu0
    %v2047 = vadd.f32 %v2006, %v2046
    %v2048 = vpop.f32.mrf.mxu0
    %2049 = vdwg.mxu0
    %v2050 = vtanh.pop %v2044
    %v2051 = vtanh.pop %v2047
    %2052 = vst [vmem:[#allocation10] sm:$0xff] %v2050
    %2053 = vst [vmem:[#allocation10 + $0x8] sm:$0xff] %v2051
    %v2054 = vpack.c.bf16 %v2051, %v2050
    %v2055 = vld [vmem:[#allocation8] sm:$0xf]
    %v2056 = vld [vmem:[#allocation8 + $0x4] sm:$0xf]
    %v2057 = vld [vmem:[#allocation8 + $0x8] sm:$0xf]
    %v2058 = vld [vmem:[#allocation8 + $0xc] sm:$0xf]
    %v2059 = vld [vmem:[#allocation8 + $0x10] sm:$0xf]
    %v2060 = vld [vmem:[#allocation8 + $0x14] sm:$0xf]
    %v2061 = vld [vmem:[#allocation8 + $0x18] sm:$0xf]
    %v2062 = vld [vmem:[#allocation8 + $0x1c] sm:$0xf]
    %v2063 = vld [vmem:[#allocation8 + $0x20] sm:$0xf]
    %v2064 = vld [vmem:[#allocation8 + $0x24] sm:$0xf]
    %v2065 = vld [vmem:[#allocation8 + $0x28] sm:$0xf]
    %v2066 = vld [vmem:[#allocation8 + $0x2c] sm:$0xf]
    %v2067 = vld [vmem:[#allocation8 + $0x30] sm:$0xf]
    %v2068 = vld [vmem:[#allocation8 + $0x34] sm:$0xf]
    %v2069 = vld [vmem:[#allocation8 + $0x38] sm:$0xf]
    %v2070 = vld [vmem:[#allocation8 + $0x3c] sm:$0xf]
    %v2071 = vld [vmem:[%s4] sm:$0x1]
    %v2073 = vlaneseq
    %v2074 = vshrl.u32 %v2073, 7
    %v2075 = vsub.s32 0, %v2074
    %v2076 = vrot.slane %v2071, %v2075
    %v2094 = vunpack.c.l.b16 %v2055
    %v2095 = vunpack.c.l.b16 %v2056
    %v2096 = vunpack.c.l.b16 %v2057
    %v2097 = vunpack.c.l.b16 %v2058
    %v2098 = vunpack.c.l.b16 %v2059
    %v2099 = vunpack.c.l.b16 %v2060
    %v2100 = vunpack.c.l.b16 %v2061
    %v2101 = vunpack.c.l.b16 %v2062
    %v2102 = vunpack.c.l.b16 %v2063
    %v2103 = vunpack.c.l.b16 %v2064
    %v2104 = vunpack.c.l.b16 %v2065
    %v2105 = vunpack.c.l.b16 %v2066
    %v2106 = vunpack.c.l.b16 %v2067
    %v2107 = vunpack.c.l.b16 %v2068
    %v2108 = vunpack.c.l.b16 %v2069
    %v2109 = vunpack.c.l.b16 %v2070
    %v2110 = vpack.c.b16 %v2095, %v2094
    %v2111 = vpack.c.b16 %v2097, %v2096
    %v2112 = vpack.c.b16 %v2099, %v2098
    %v2113 = vpack.c.b16 %v2101, %v2100
    %v2114 = vpack.c.b16 %v2103, %v2102
    %v2115 = vpack.c.b16 %v2105, %v2104
    %v2116 = vpack.c.b16 %v2107, %v2106
    %v2117 = vpack.c.b16 %v2109, %v2108
    %2126 = vmatprep.subr.bf16.mxu0 0
    %2127 = vmatpush1.bf16.msra.mxu0 %v2117
    %2128 = vmatprep.subr.bf16.mxu0 0
    %2129 = vmatpush1.bf16.msra.mxu0 %v2116
    %2130 = vmatprep.subr.bf16.mxu0 0
    %2131 = vmatpush1.bf16.msra.mxu0 %v2115
    %2132 = vmatprep.subr.bf16.mxu0 0
    %2133 = vmatpush1.bf16.msra.mxu0 %v2114
    %2134 = vmatprep.subr.bf16.mxu0 0
    %2135 = vmatpush1.bf16.msra.mxu0 %v2113
    %2136 = vmatprep.subr.bf16.mxu0 0
    %2137 = vmatpush1.bf16.msra.mxu0 %v2112
    %2138 = vmatprep.subr.bf16.mxu0 0
    %2139 = vmatpush1.bf16.msra.mxu0 %v2111
    %2140 = vmatprep.subr.bf16.mxu0 0
    %2141 = vmatpush1.bf16.msra.mxu0 %v2110
    %2142 = vmatprep.subr.bf16.mxu0 0
    %2143 = vmatpush2.bf16.msra.mxu0 0
    %2144 = vmatprep.subr.bf16.mxu0 0
    %2145 = vmatpush2.bf16.msra.mxu0 0
    %2146 = vmatprep.subr.bf16.mxu0 0
    %2147 = vmatpush2.bf16.msra.mxu0 0
    %2148 = vmatprep.subr.bf16.mxu0 0
    %2149 = vmatpush2.bf16.msra.mxu0 0
    %2150 = vmatprep.subr.bf16.mxu0 0
    %2151 = vmatpush2.bf16.msra.mxu0 0
    %2152 = vmatprep.subr.bf16.mxu0 0
    %2153 = vmatpush2.bf16.msra.mxu0 0
    %2154 = vmatprep.subr.bf16.mxu0 0
    %2155 = vmatpush2.bf16.msra.mxu0 0
    %2156 = vmatprep.subr.bf16.mxu0 0
    %2157 = vmatpush2.bf16.msra.mxu0 0
    %2158 = vmatprep.mubr.bf16.mxu0 0
    %2159 = vmatmul.mubr.bf16.gmra.mxu0 %v2054
    %v2160 = vpop.f32.mrf.mxu0
    %v2161 = vadd.f32 %v2076, %v2160
    %v2162 = vpop.f32.mrf.mxu0
    %v2163 = vpop.f32.mrf.mxu0
    %v2164 = vadd.f32 %v2076, %v2163
    %v2165 = vpop.f32.mrf.mxu0
    %2166 = vdwg.mxu0
    %2167 = vmax.xlane.f32.xlu0 %v2161
    %v2168 = vpop.xlane.xlu0 %2167
    %2169 = vmax.xlane.f32.xlu0 %v2164
    %v2170 = vpop.xlane.xlu0 %2169
    %v2171 = vsub.f32 %v2161, %v2168
    %v2172 = vsub.f32 %v2164, %v2170
    %v2173 = vmul.f32 %v2171, 1.442695
    %v2174 = vpow.pop %v2173
    %v2175 = vmul.f32 %v2172, 1.442695
    %v2176 = vpow.pop %v2175
    %2177 = vadd.xlane.f32.xlu0 %v2174
    %v2178 = vpop.xlane.xlu0 %2177
    %2179 = vadd.xlane.f32.xlu0 %v2176
    %v2180 = vpop.xlane.xlu0 %2179
    %v2181 = vrcp.pop %v2178
    %v2182 = vmul.f32 %v2174, %v2181
    %v2183 = vrcp.pop %v2180
    %v2184 = vmul.f32 %v2176, %v2183
    %2185 = vst [vmem:[#allocation11] sm:$0xff] %v2182
    %2186 = vst [vmem:[#allocation11 + $0x8] sm:$0xff] %v2184
    // Predicated region
    $region38: #{tfidf_nn_forward.1} parent=1 // pred_check
      _
    $region39: #{tfidf_nn_forward.1} parent=1 // pred_check_branch
      %2188 = sbr.rel (0) target = $region41
    $region40: #{tfidf_nn_forward.1} parent=1 // pred_region
      %s2190 = ssub.s32 256, 32
      %2191 = vsyncadd [#allocation4], %s2190
      %s2192 = sshll.u32 [#allocation10], 4
      %s2193 = int_to_ptr.vmem [resolvable:$true] %s2192
      %2198 = dma.vmem_to_hbm [thread:$0]  %s2193, 32, %s5, [#allocation4], 32, 32, 2
    $region41: #{tfidf_nn_forward.1} parent=1 // pred_fallthru
      _
    // Predicated region
    $region42: #{tfidf_nn_forward.1} parent=1 // pred_check
      _
    $region43: #{tfidf_nn_forward.1} parent=1 // pred_check_branch
      %2200 = sbr.rel (0) target = $region45
    $region44: #{tfidf_nn_forward.1} parent=1 // pred_region
      %s2202 = ssub.s32 256, 32
      %2203 = vsyncadd [#allocation12], %s2202
      %s2204 = sshll.u32 [#allocation11], 4
      %s2205 = int_to_ptr.vmem [resolvable:$true] %s2204
      %2210 = dma.vmem_to_hbm [thread:$0]  %s2205, 32, %s6, [#allocation12], 32, 32, 2
    $region45: #{tfidf_nn_forward.1} parent=1 // pred_fallthru
      _
    // Predicated region
    $region46: #{tfidf_nn_forward.1} parent=1 // pred_check
      _
    $region47: #{tfidf_nn_forward.1} parent=1 // pred_check_branch
      %2212 = sbr.rel (0) target = $region49
    $region48: #{tfidf_nn_forward.1} parent=1 // pred_region
      %2213 = dma.done [#allocation4], 256
    $region49: #{tfidf_nn_forward.1} parent=1 // pred_fallthru
      _
    // Predicated region
    $region50: #{tfidf_nn_forward.1} parent=1 // pred_check
      _
    $region51: #{tfidf_nn_forward.1} parent=1 // pred_check_branch
      %2215 = sbr.rel (0) target = $region53
    $region52: #{tfidf_nn_forward.1} parent=1 // pred_region
      %2216 = dma.done [#allocation12], 256
    $region53: #{tfidf_nn_forward.1} parent=1 // pred_fallthru
      _
    %2217 = vsyncpa [#allocation3], 1
    %2218 = vsyncpa [#allocation6], 1
    %2219 = vsyncpa [#allocation9], 1
    %2220 = vsyncpa [#allocation4], 1
    %2221 = vsyncpa [#allocation12], 1

</llo_original>
